<compile_context>
chip_gen: v7x
topology: tpu7x:2x2x1
jax: 0.10.0
libtpu: 0.0.40
codegen_flags: <defaults>
</compile_context>

<pallas_src>
import functools

import jax
import jax.numpy as jnp
from jax import lax
from jax.experimental import pallas as pl
from jax.experimental.pallas import tpu as pltpu


def rnn_seq_kernel(x_ref, h0_ref, wxh_ref, whh_ref, bh_ref, wxo_ref, who_ref, bo_ref,
                   out_ref, hfin_ref, hall_ref, gxh_ref):
    """Runs T steps of the RNN.forward with everything resident in VMEM.

    x_ref    : (T*B, I)   inputs for all timesteps (row block t*B..(t+1)*B = step t)
    h0_ref   : (B, H)     initial hidden
    wxh/whh  : (I, H)/(H, H)  split i2h weight (pre-transposed), bh: (1, H)
    wxo/who  : (I, O)/(H, O)  split i2o weight (pre-transposed), bo: (1, O)
    out_ref  : (T*B, O)   log-softmax outputs for every step (lane-dense slab)
    hfin_ref : (B, H)     final hidden state (aliased onto h0 in HBM)
    hall_ref : ((T+1)*B, H) scratch; rows [t*B,(t+1)*B) = hidden fed INTO step t
    gxh_ref  : (T*B, H)   scratch; hoisted x @ Wx_h + b_h for every step
    """
    TB = x_ref.shape[0]
    B, H = h0_ref.shape
    T = TB // B

    x = x_ref[...]                                  # (T*B, I)
    whh = whh_ref[...]                              # (H, H) resident across the recurrence

    # --- Hoisted, non-recurrent input projection for i2h: one big MXU matmul. ---
    gxh_ref[...] = (jnp.dot(x, wxh_ref[...], preferred_element_type=jnp.float32)
                    + bh_ref[...])

    # hall rows [0, B) hold h0 (the hidden fed into step 0).
    hall_ref[pl.ds(0, B), :] = h0_ref[...]

    # --- Serial recurrence: only h_{t-1} @ Wh_h per step is on the critical path. ---
    def step(t, carry):
        row = pl.multiple_of(t * B, B)
        h_prev = hall_ref[pl.ds(row, B), :]                       # h_{t-1}
        h_new = gxh_ref[pl.ds(row, B), :] + jnp.dot(
            h_prev, whh, preferred_element_type=jnp.float32)      # i2h(cat(x_t, h_{t-1}))
        hall_ref[pl.ds(row + B, B), :] = h_new                    # hidden fed into step t+1
        return carry

    lax.fori_loop(0, T, step, None, unroll=True)

    # --- Epilogue: i2o projection + log-softmax for ALL steps in one batched shot. ---
    h_prev_all = hall_ref[pl.ds(0, TB), :]          # (T*B, H): h_{t-1} for every step
    logits = (jnp.dot(x, wxo_ref[...], preferred_element_type=jnp.float32)
              + jnp.dot(h_prev_all, who_ref[...], preferred_element_type=jnp.float32)
              + bo_ref[...])                        # (T*B, O)
    m = jnp.max(logits, axis=1, keepdims=True)
    lse = m + jnp.log(jnp.sum(jnp.exp(logits - m), axis=1, keepdims=True))
    out_ref[...] = logits - lse                     # LogSoftmax(dim=1), one slab store
    hfin_ref[...] = hall_ref[pl.ds(TB, B), :]       # final hidden h_T


@functools.partial(jax.jit, donate_argnums=(1,))    # donate h0 -> true in-place update
def rnn_sequence(x_seq, h0, wxh, whh, bh, wxo, who, bo):
    """Applies the module's forward T times; returns (outputs (T,B,O), final hidden)."""
    T, B, I = x_seq.shape
    H = h0.shape[1]
    O = who.shape[1]
    x2d = x_seq.reshape(T * B, I)                   # layout plumbing only (free reshape)

    full = lambda shape: pl.BlockSpec(shape, lambda: (0,) * len(shape))

    cost = pl.CostEstimate(
        flops=2 * T * B * (I + H) * (H + O),
        transcendentals=T * B * (O + 1),
        bytes_accessed=4 * (T * B * I + B * H + (I + H) * (H + O) + H + O
                            + T * B * O + B * H),
    )

    out2d, h_final = pl.pallas_call(
        rnn_seq_kernel,
        out_shape=(
            jax.ShapeDtypeStruct((T * B, O), jnp.float32),
            jax.ShapeDtypeStruct((B, H), jnp.float32),
        ),
        grid=(),
        in_specs=[
            full((T * B, I)), full((B, H)),
            full(wxh.shape), full(whh.shape), full(bh.shape),
            full(wxo.shape), full(who.shape), full(bo.shape),
        ],
        out_specs=(full((T * B, O)), full((B, H))),
        scratch_shapes=[
            pltpu.VMEM(((T + 1) * B, H), jnp.float32),   # all carried hidden states
            pltpu.VMEM((T * B, H), jnp.float32),         # hoisted x @ Wx_h + b_h
        ],
        input_output_aliases={1: 1},                     # h0  <->  final hidden
        cost_estimate=cost,
        compiler_params=pltpu.CompilerParams(vmem_limit_bytes=32 * 1024 * 1024),
    )(x2d, h0, wxh, whh, bh, wxo, who, bo)

    return out2d.reshape(T, B, O), h_final


def init_params(key, input_size, hidden_size, output_size):
    # Deterministic init mimicking nn.Linear: U(-1/sqrt(fan_in), 1/sqrt(fan_in)).
    k1, k2, k3, k4 = jax.random.split(key, 4)
    fan_in = input_size + hidden_size
    bound = 1.0 / jnp.sqrt(fan_in)
    w_ih = jax.random.uniform(k1, (fan_in, hidden_size), jnp.float32, -bound, bound)
    b_ih = jax.random.uniform(k2, (1, hidden_size), jnp.float32, -bound, bound)
    w_io = jax.random.uniform(k3, (fan_in, output_size), jnp.float32, -bound, bound)
    b_io = jax.random.uniform(k4, (1, output_size), jnp.float32, -bound, bound)
    wxh, whh = w_ih[:input_size, :], w_ih[input_size:, :]
    wxo, who = w_io[:input_size, :], w_io[input_size:, :]
    return wxh, whh, b_ih, wxo, who, b_io


if __name__ == "__main__":
    T, B, INPUT, HIDDEN, OUTPUT = 16, 8, 10, 32, 16

    key = jax.random.PRNGKey(0)
    kx, kh, kp = jax.random.split(key, 3)
    x_seq = jax.random.normal(kx, (T, B, INPUT), jnp.float32)
    h0 = jax.random.normal(kh, (B, HIDDEN), jnp.float32)
    wxh, whh, bh, wxo, who, bo = init_params(kp, INPUT, HIDDEN, OUTPUT)

    # Pure-JAX reference: the PyTorch module's forward applied T times
    # (computed BEFORE the kernel call because h0 is donated/aliased).
    w_ih = jnp.concatenate([wxh, whh], axis=0)
    w_io = jnp.concatenate([wxo, who], axis=0)
    h = h0
    outs = []
    for t in range(T):
        combined = jnp.concatenate([x_seq[t], h], axis=1)
        h_next = combined @ w_ih + bh                       # i2h (no nonlinearity)
        outs.append(jax.nn.log_softmax(combined @ w_io + bo, axis=1))
        h = h_next
    out_expected = jnp.stack(outs)                          # (T, B, O)
    h_expected = h

    out, h_final = rnn_sequence(x_seq, h0, wxh, whh, bh, wxo, who, bo)
    jax.block_until_ready((out, h_final))

    assert jnp.allclose(out, out_expected, atol=1e-4, rtol=1e-4)
    assert jnp.allclose(h_final, h_expected, atol=1e-4, rtol=1e-4)
    print("KERNEL_OK")
</pallas_src>

<mosaic_0001>
module attributes {stable_mosaic.version = 11 : i64} {
  func.func @rnn_seq_kernel(%arg0: memref<128x10xf32, #tpu.memory_space<vmem>>, %arg1: memref<8x32xf32, #tpu.memory_space<vmem>>, %arg2: memref<10x32xf32, #tpu.memory_space<vmem>>, %arg3: memref<32x32xf32, #tpu.memory_space<vmem>>, %arg4: memref<1x32xf32, #tpu.memory_space<vmem>>, %arg5: memref<10x16xf32, #tpu.memory_space<vmem>>, %arg6: memref<32x16xf32, #tpu.memory_space<vmem>>, %arg7: memref<1x16xf32, #tpu.memory_space<vmem>>, %arg8: memref<128x16xf32, #tpu.memory_space<vmem>>, %arg9: memref<8x32xf32, #tpu.memory_space<vmem>>, %arg10: memref<136x32xf32, #tpu.memory_space<vmem>>, %arg11: memref<128x32xf32, #tpu.memory_space<vmem>>) attributes {dimension_semantics = [], scalar_prefetch = 0 : i64, scratch_operands = 2 : i64, tpu.core_type = #tpu.core_type<tc>} {
    %c0 = arith.constant 0 : index
    %c0_0 = arith.constant 0 : index
    %0 = vector.load %arg0[%c0, %c0_0] : memref<128x10xf32, #tpu.memory_space<vmem>>, vector<128x10xf32>
    %c0_1 = arith.constant 0 : index
    %c0_2 = arith.constant 0 : index
    %1 = vector.load %arg3[%c0_1, %c0_2] : memref<32x32xf32, #tpu.memory_space<vmem>>, vector<32x32xf32>
    %c0_3 = arith.constant 0 : index
    %c0_4 = arith.constant 0 : index
    %2 = vector.load %arg2[%c0_3, %c0_4] : memref<10x32xf32, #tpu.memory_space<vmem>>, vector<10x32xf32>
    %cst = arith.constant dense<0.000000e+00> : vector<128x32xf32>
    %3 = tpu.matmul %0, %2, %cst {dimension_numbers = #tpu.dot_dimension_numbers<[1], [0], [0], [1], [0, 0, 1, 1], [], []>} : vector<128x10xf32>, vector<10x32xf32>, vector<128x32xf32> -> vector<128x32xf32>
    %c0_5 = arith.constant 0 : index
    %c0_6 = arith.constant 0 : index
    %4 = vector.load %arg4[%c0_5, %c0_6] : memref<1x32xf32, #tpu.memory_space<vmem>>, vector<1x32xf32>
    %5 = vector.broadcast %4 : vector<1x32xf32> to vector<128x32xf32>
    %6 = arith.addf %3, %5 : vector<128x32xf32>
    %c0_7 = arith.constant 0 : index
    %c0_8 = arith.constant 0 : index
    %7 = vector.load %arg11[%c0_7, %c0_8] : memref<128x32xf32, #tpu.memory_space<vmem>>, vector<128x32xf32>
    tpu.vector_store %arg11[%c0_7, %c0_8], %6 {strides = array<i32>} : memref<128x32xf32, #tpu.memory_space<vmem>>, vector<128x32xf32>,
    %c0_9 = arith.constant 0 : index
    %c0_10 = arith.constant 0 : index
    %8 = vector.load %arg1[%c0_9, %c0_10] : memref<8x32xf32, #tpu.memory_space<vmem>>, vector<8x32xf32>
    %c0_11 = arith.constant 0 : index
    %c0_12 = arith.constant 0 : index
    %9 = vector.load %arg10[%c0_11, %c0_12] : memref<136x32xf32, #tpu.memory_space<vmem>>, vector<8x32xf32>
    tpu.vector_store %arg10[%c0_11, %c0_12], %8 {strides = array<i32>} : memref<136x32xf32, #tpu.memory_space<vmem>>, vector<8x32xf32>,
    %c0_i32 = arith.constant 0 : i32
    %c8_i32 = arith.constant 8 : i32
    %10 = arith.muli %c0_i32, %c8_i32 : i32
    %11 = tpu.assume_multiple %10, 8 : i32
    %12 = arith.index_cast %11 : i32 to index
    %c0_13 = arith.constant 0 : index
    %13 = vector.load %arg10[%12, %c0_13] : memref<136x32xf32, #tpu.memory_space<vmem>>, vector<8x32xf32>
    %14 = arith.index_cast %11 : i32 to index
    %c0_14 = arith.constant 0 : index
    %15 = vector.load %arg11[%14, %c0_14] : memref<128x32xf32, #tpu.memory_space<vmem>>, vector<8x32xf32>
    %cst_15 = arith.constant dense<0.000000e+00> : vector<8x32xf32>
    %16 = tpu.matmul %13, %1, %cst_15 {dimension_numbers = #tpu.dot_dimension_numbers<[1], [0], [0], [1], [0, 0, 1, 1], [], []>} : vector<8x32xf32>, vector<32x32xf32>, vector<8x32xf32> -> vector<8x32xf32>
    %17 = arith.addf %15, %16 : vector<8x32xf32>
    %c8_i32_16 = arith.constant 8 : i32
    %18 = arith.addi %11, %c8_i32_16 : i32
    %19 = arith.index_cast %18 : i32 to index
    %c0_17 = arith.constant 0 : index
    %20 = vector.load %arg10[%19, %c0_17] : memref<136x32xf32, #tpu.memory_space<vmem>>, vector<8x32xf32>
    tpu.vector_store %arg10[%19, %c0_17], %17 {strides = array<i32>} : memref<136x32xf32, #tpu.memory_space<vmem>>, vector<8x32xf32>,
    %c1_i32 = arith.constant 1 : i32
    %c8_i32_18 = arith.constant 8 : i32
    %21 = arith.muli %c1_i32, %c8_i32_18 : i32
    %22 = tpu.assume_multiple %21, 8 : i32
    %23 = arith.index_cast %22 : i32 to index
    %c0_19 = arith.constant 0 : index
    %24 = vector.load %arg10[%23, %c0_19] : memref<136x32xf32, #tpu.memory_space<vmem>>, vector<8x32xf32>
    %25 = arith.index_cast %22 : i32 to index
    %c0_20 = arith.constant 0 : index
    %26 = vector.load %arg11[%25, %c0_20] : memref<128x32xf32, #tpu.memory_space<vmem>>, vector<8x32xf32>
    %cst_21 = arith.constant dense<0.000000e+00> : vector<8x32xf32>
    %27 = tpu.matmul %24, %1, %cst_21 {dimension_numbers = #tpu.dot_dimension_numbers<[1], [0], [0], [1], [0, 0, 1, 1], [], []>} : vector<8x32xf32>, vector<32x32xf32>, vector<8x32xf32> -> vector<8x32xf32>
    %28 = arith.addf %26, %27 : vector<8x32xf32>
    %c8_i32_22 = arith.constant 8 : i32
    %29 = arith.addi %22, %c8_i32_22 : i32
    %30 = arith.index_cast %29 : i32 to index
    %c0_23 = arith.constant 0 : index
    %31 = vector.load %arg10[%30, %c0_23] : memref<136x32xf32, #tpu.memory_space<vmem>>, vector<8x32xf32>
    tpu.vector_store %arg10[%30, %c0_23], %28 {strides = array<i32>} : memref<136x32xf32, #tpu.memory_space<vmem>>, vector<8x32xf32>,
    %c2_i32 = arith.constant 2 : i32
    %c8_i32_24 = arith.constant 8 : i32
    %32 = arith.muli %c2_i32, %c8_i32_24 : i32
    %33 = tpu.assume_multiple %32, 8 : i32
    %34 = arith.index_cast %33 : i32 to index
    %c0_25 = arith.constant 0 : index
    %35 = vector.load %arg10[%34, %c0_25] : memref<136x32xf32, #tpu.memory_space<vmem>>, vector<8x32xf32>
    %36 = arith.index_cast %33 : i32 to index
    %c0_26 = arith.constant 0 : index
    %37 = vector.load %arg11[%36, %c0_26] : memref<128x32xf32, #tpu.memory_space<vmem>>, vector<8x32xf32>
    %cst_27 = arith.constant dense<0.000000e+00> : vector<8x32xf32>
    %38 = tpu.matmul %35, %1, %cst_27 {dimension_numbers = #tpu.dot_dimension_numbers<[1], [0], [0], [1], [0, 0, 1, 1], [], []>} : vector<8x32xf32>, vector<32x32xf32>, vector<8x32xf32> -> vector<8x32xf32>
    %39 = arith.addf %37, %38 : vector<8x32xf32>
    %c8_i32_28 = arith.constant 8 : i32
    %40 = arith.addi %33, %c8_i32_28 : i32
    %41 = arith.index_cast %40 : i32 to index
    %c0_29 = arith.constant 0 : index
    %42 = vector.load %arg10[%41, %c0_29] : memref<136x32xf32, #tpu.memory_space<vmem>>, vector<8x32xf32>
    tpu.vector_store %arg10[%41, %c0_29], %39 {strides = array<i32>} : memref<136x32xf32, #tpu.memory_space<vmem>>, vector<8x32xf32>,
    %c3_i32 = arith.constant 3 : i32
    %c8_i32_30 = arith.constant 8 : i32
    %43 = arith.muli %c3_i32, %c8_i32_30 : i32
    %44 = tpu.assume_multiple %43, 8 : i32
    %45 = arith.index_cast %44 : i32 to index
    %c0_31 = arith.constant 0 : index
    %46 = vector.load %arg10[%45, %c0_31] : memref<136x32xf32, #tpu.memory_space<vmem>>, vector<8x32xf32>
    %47 = arith.index_cast %44 : i32 to index
    %c0_32 = arith.constant 0 : index
    %48 = vector.load %arg11[%47, %c0_32] : memref<128x32xf32, #tpu.memory_space<vmem>>, vector<8x32xf32>
    %cst_33 = arith.constant dense<0.000000e+00> : vector<8x32xf32>
    %49 = tpu.matmul %46, %1, %cst_33 {dimension_numbers = #tpu.dot_dimension_numbers<[1], [0], [0], [1], [0, 0, 1, 1], [], []>} : vector<8x32xf32>, vector<32x32xf32>, vector<8x32xf32> -> vector<8x32xf32>
    %50 = arith.addf %48, %49 : vector<8x32xf32>
    %c8_i32_34 = arith.constant 8 : i32
    %51 = arith.addi %44, %c8_i32_34 : i32
    %52 = arith.index_cast %51 : i32 to index
    %c0_35 = arith.constant 0 : index
    %53 = vector.load %arg10[%52, %c0_35] : memref<136x32xf32, #tpu.memory_space<vmem>>, vector<8x32xf32>
    tpu.vector_store %arg10[%52, %c0_35], %50 {strides = array<i32>} : memref<136x32xf32, #tpu.memory_space<vmem>>, vector<8x32xf32>,
    %c4_i32 = arith.constant 4 : i32
    %c8_i32_36 = arith.constant 8 : i32
    %54 = arith.muli %c4_i32, %c8_i32_36 : i32
    %55 = tpu.assume_multiple %54, 8 : i32
    %56 = arith.index_cast %55 : i32 to index
    %c0_37 = arith.constant 0 : index
    %57 = vector.load %arg10[%56, %c0_37] : memref<136x32xf32, #tpu.memory_space<vmem>>, vector<8x32xf32>
    %58 = arith.index_cast %55 : i32 to index
    %c0_38 = arith.constant 0 : index
    %59 = vector.load %arg11[%58, %c0_38] : memref<128x32xf32, #tpu.memory_space<vmem>>, vector<8x32xf32>
    %cst_39 = arith.constant dense<0.000000e+00> : vector<8x32xf32>
    %60 = tpu.matmul %57, %1, %cst_39 {dimension_numbers = #tpu.dot_dimension_numbers<[1], [0], [0], [1], [0, 0, 1, 1], [], []>} : vector<8x32xf32>, vector<32x32xf32>, vector<8x32xf32> -> vector<8x32xf32>
    %61 = arith.addf %59, %60 : vector<8x32xf32>
    %c8_i32_40 = arith.constant 8 : i32
    %62 = arith.addi %55, %c8_i32_40 : i32
    %63 = arith.index_cast %62 : i32 to index
    %c0_41 = arith.constant 0 : index
    %64 = vector.load %arg10[%63, %c0_41] : memref<136x32xf32, #tpu.memory_space<vmem>>, vector<8x32xf32>
    tpu.vector_store %arg10[%63, %c0_41], %61 {strides = array<i32>} : memref<136x32xf32, #tpu.memory_space<vmem>>, vector<8x32xf32>,
    %c5_i32 = arith.constant 5 : i32
    %c8_i32_42 = arith.constant 8 : i32
    %65 = arith.muli %c5_i32, %c8_i32_42 : i32
    %66 = tpu.assume_multiple %65, 8 : i32
    %67 = arith.index_cast %66 : i32 to index
    %c0_43 = arith.constant 0 : index
    %68 = vector.load %arg10[%67, %c0_43] : memref<136x32xf32, #tpu.memory_space<vmem>>, vector<8x32xf32>
    %69 = arith.index_cast %66 : i32 to index
    %c0_44 = arith.constant 0 : index
    %70 = vector.load %arg11[%69, %c0_44] : memref<128x32xf32, #tpu.memory_space<vmem>>, vector<8x32xf32>
    %cst_45 = arith.constant dense<0.000000e+00> : vector<8x32xf32>
    %71 = tpu.matmul %68, %1, %cst_45 {dimension_numbers = #tpu.dot_dimension_numbers<[1], [0], [0], [1], [0, 0, 1, 1], [], []>} : vector<8x32xf32>, vector<32x32xf32>, vector<8x32xf32> -> vector<8x32xf32>
    %72 = arith.addf %70, %71 : vector<8x32xf32>
    %c8_i32_46 = arith.constant 8 : i32
    %73 = arith.addi %66, %c8_i32_46 : i32
    %74 = arith.index_cast %73 : i32 to index
    %c0_47 = arith.constant 0 : index
    %75 = vector.load %arg10[%74, %c0_47] : memref<136x32xf32, #tpu.memory_space<vmem>>, vector<8x32xf32>
    tpu.vector_store %arg10[%74, %c0_47], %72 {strides = array<i32>} : memref<136x32xf32, #tpu.memory_space<vmem>>, vector<8x32xf32>,
    %c6_i32 = arith.constant 6 : i32
    %c8_i32_48 = arith.constant 8 : i32
    %76 = arith.muli %c6_i32, %c8_i32_48 : i32
    %77 = tpu.assume_multiple %76, 8 : i32
    %78 = arith.index_cast %77 : i32 to index
    %c0_49 = arith.constant 0 : index
    %79 = vector.load %arg10[%78, %c0_49] : memref<136x32xf32, #tpu.memory_space<vmem>>, vector<8x32xf32>
    %80 = arith.index_cast %77 : i32 to index
    %c0_50 = arith.constant 0 : index
    %81 = vector.load %arg11[%80, %c0_50] : memref<128x32xf32, #tpu.memory_space<vmem>>, vector<8x32xf32>
    %cst_51 = arith.constant dense<0.000000e+00> : vector<8x32xf32>
    %82 = tpu.matmul %79, %1, %cst_51 {dimension_numbers = #tpu.dot_dimension_numbers<[1], [0], [0], [1], [0, 0, 1, 1], [], []>} : vector<8x32xf32>, vector<32x32xf32>, vector<8x32xf32> -> vector<8x32xf32>
    %83 = arith.addf %81, %82 : vector<8x32xf32>
    %c8_i32_52 = arith.constant 8 : i32
    %84 = arith.addi %77, %c8_i32_52 : i32
    %85 = arith.index_cast %84 : i32 to index
    %c0_53 = arith.constant 0 : index
    %86 = vector.load %arg10[%85, %c0_53] : memref<136x32xf32, #tpu.memory_space<vmem>>, vector<8x32xf32>
    tpu.vector_store %arg10[%85, %c0_53], %83 {strides = array<i32>} : memref<136x32xf32, #tpu.memory_space<vmem>>, vector<8x32xf32>,
    %c7_i32 = arith.constant 7 : i32
    %c8_i32_54 = arith.constant 8 : i32
    %87 = arith.muli %c7_i32, %c8_i32_54 : i32
    %88 = tpu.assume_multiple %87, 8 : i32
    %89 = arith.index_cast %88 : i32 to index
    %c0_55 = arith.constant 0 : index
    %90 = vector.load %arg10[%89, %c0_55] : memref<136x32xf32, #tpu.memory_space<vmem>>, vector<8x32xf32>
    %91 = arith.index_cast %88 : i32 to index
    %c0_56 = arith.constant 0 : index
    %92 = vector.load %arg11[%91, %c0_56] : memref<128x32xf32, #tpu.memory_space<vmem>>, vector<8x32xf32>
    %cst_57 = arith.constant dense<0.000000e+00> : vector<8x32xf32>
    %93 = tpu.matmul %90, %1, %cst_57 {dimension_numbers = #tpu.dot_dimension_numbers<[1], [0], [0], [1], [0, 0, 1, 1], [], []>} : vector<8x32xf32>, vector<32x32xf32>, vector<8x32xf32> -> vector<8x32xf32>
    %94 = arith.addf %92, %93 : vector<8x32xf32>
    %c8_i32_58 = arith.constant 8 : i32
    %95 = arith.addi %88, %c8_i32_58 : i32
    %96 = arith.index_cast %95 : i32 to index
    %c0_59 = arith.constant 0 : index
    %97 = vector.load %arg10[%96, %c0_59] : memref<136x32xf32, #tpu.memory_space<vmem>>, vector<8x32xf32>
    tpu.vector_store %arg10[%96, %c0_59], %94 {strides = array<i32>} : memref<136x32xf32, #tpu.memory_space<vmem>>, vector<8x32xf32>,
    %c8_i32_60 = arith.constant 8 : i32
    %c8_i32_61 = arith.constant 8 : i32
    %98 = arith.muli %c8_i32_60, %c8_i32_61 : i32
    %99 = tpu.assume_multiple %98, 8 : i32
    %100 = arith.index_cast %99 : i32 to index
    %c0_62 = arith.constant 0 : index
    %101 = vector.load %arg10[%100, %c0_62] : memref<136x32xf32, #tpu.memory_space<vmem>>, vector<8x32xf32>
    %102 = arith.index_cast %99 : i32 to index
    %c0_63 = arith.constant 0 : index
    %103 = vector.load %arg11[%102, %c0_63] : memref<128x32xf32, #tpu.memory_space<vmem>>, vector<8x32xf32>
    %cst_64 = arith.constant dense<0.000000e+00> : vector<8x32xf32>
    %104 = tpu.matmul %101, %1, %cst_64 {dimension_numbers = #tpu.dot_dimension_numbers<[1], [0], [0], [1], [0, 0, 1, 1], [], []>} : vector<8x32xf32>, vector<32x32xf32>, vector<8x32xf32> -> vector<8x32xf32>
    %105 = arith.addf %103, %104 : vector<8x32xf32>
    %c8_i32_65 = arith.constant 8 : i32
    %106 = arith.addi %99, %c8_i32_65 : i32
    %107 = arith.index_cast %106 : i32 to index
    %c0_66 = arith.constant 0 : index
    %108 = vector.load %arg10[%107, %c0_66] : memref<136x32xf32, #tpu.memory_space<vmem>>, vector<8x32xf32>
    tpu.vector_store %arg10[%107, %c0_66], %105 {strides = array<i32>} : memref<136x32xf32, #tpu.memory_space<vmem>>, vector<8x32xf32>,
    %c9_i32 = arith.constant 9 : i32
    %c8_i32_67 = arith.constant 8 : i32
    %109 = arith.muli %c9_i32, %c8_i32_67 : i32
    %110 = tpu.assume_multiple %109, 8 : i32
    %111 = arith.index_cast %110 : i32 to index
    %c0_68 = arith.constant 0 : index
    %112 = vector.load %arg10[%111, %c0_68] : memref<136x32xf32, #tpu.memory_space<vmem>>, vector<8x32xf32>
    %113 = arith.index_cast %110 : i32 to index
    %c0_69 = arith.constant 0 : index
    %114 = vector.load %arg11[%113, %c0_69] : memref<128x32xf32, #tpu.memory_space<vmem>>, vector<8x32xf32>
    %cst_70 = arith.constant dense<0.000000e+00> : vector<8x32xf32>
    %115 = tpu.matmul %112, %1, %cst_70 {dimension_numbers = #tpu.dot_dimension_numbers<[1], [0], [0], [1], [0, 0, 1, 1], [], []>} : vector<8x32xf32>, vector<32x32xf32>, vector<8x32xf32> -> vector<8x32xf32>
    %116 = arith.addf %114, %115 : vector<8x32xf32>
    %c8_i32_71 = arith.constant 8 : i32
    %117 = arith.addi %110, %c8_i32_71 : i32
    %118 = arith.index_cast %117 : i32 to index
    %c0_72 = arith.constant 0 : index
    %119 = vector.load %arg10[%118, %c0_72] : memref<136x32xf32, #tpu.memory_space<vmem>>, vector<8x32xf32>
    tpu.vector_store %arg10[%118, %c0_72], %116 {strides = array<i32>} : memref<136x32xf32, #tpu.memory_space<vmem>>, vector<8x32xf32>,
    %c10_i32 = arith.constant 10 : i32
    %c8_i32_73 = arith.constant 8 : i32
    %120 = arith.muli %c10_i32, %c8_i32_73 : i32
    %121 = tpu.assume_multiple %120, 8 : i32
    %122 = arith.index_cast %121 : i32 to index
    %c0_74 = arith.constant 0 : index
    %123 = vector.load %arg10[%122, %c0_74] : memref<136x32xf32, #tpu.memory_space<vmem>>, vector<8x32xf32>
    %124 = arith.index_cast %121 : i32 to index
    %c0_75 = arith.constant 0 : index
    %125 = vector.load %arg11[%124, %c0_75] : memref<128x32xf32, #tpu.memory_space<vmem>>, vector<8x32xf32>
    %cst_76 = arith.constant dense<0.000000e+00> : vector<8x32xf32>
    %126 = tpu.matmul %123, %1, %cst_76 {dimension_numbers = #tpu.dot_dimension_numbers<[1], [0], [0], [1], [0, 0, 1, 1], [], []>} : vector<8x32xf32>, vector<32x32xf32>, vector<8x32xf32> -> vector<8x32xf32>
    %127 = arith.addf %125, %126 : vector<8x32xf32>
    %c8_i32_77 = arith.constant 8 : i32
    %128 = arith.addi %121, %c8_i32_77 : i32
    %129 = arith.index_cast %128 : i32 to index
    %c0_78 = arith.constant 0 : index
    %130 = vector.load %arg10[%129, %c0_78] : memref<136x32xf32, #tpu.memory_space<vmem>>, vector<8x32xf32>
    tpu.vector_store %arg10[%129, %c0_78], %127 {strides = array<i32>} : memref<136x32xf32, #tpu.memory_space<vmem>>, vector<8x32xf32>,
    %c11_i32 = arith.constant 11 : i32
    %c8_i32_79 = arith.constant 8 : i32
    %131 = arith.muli %c11_i32, %c8_i32_79 : i32
    %132 = tpu.assume_multiple %131, 8 : i32
    %133 = arith.index_cast %132 : i32 to index
    %c0_80 = arith.constant 0 : index
    %134 = vector.load %arg10[%133, %c0_80] : memref<136x32xf32, #tpu.memory_space<vmem>>, vector<8x32xf32>
    %135 = arith.index_cast %132 : i32 to index
    %c0_81 = arith.constant 0 : index
    %136 = vector.load %arg11[%135, %c0_81] : memref<128x32xf32, #tpu.memory_space<vmem>>, vector<8x32xf32>
    %cst_82 = arith.constant dense<0.000000e+00> : vector<8x32xf32>
    %137 = tpu.matmul %134, %1, %cst_82 {dimension_numbers = #tpu.dot_dimension_numbers<[1], [0], [0], [1], [0, 0, 1, 1], [], []>} : vector<8x32xf32>, vector<32x32xf32>, vector<8x32xf32> -> vector<8x32xf32>
    %138 = arith.addf %136, %137 : vector<8x32xf32>
    %c8_i32_83 = arith.constant 8 : i32
    %139 = arith.addi %132, %c8_i32_83 : i32
    %140 = arith.index_cast %139 : i32 to index
    %c0_84 = arith.constant 0 : index
    %141 = vector.load %arg10[%140, %c0_84] : memref<136x32xf32, #tpu.memory_space<vmem>>, vector<8x32xf32>
    tpu.vector_store %arg10[%140, %c0_84], %138 {strides = array<i32>} : memref<136x32xf32, #tpu.memory_space<vmem>>, vector<8x32xf32>,
    %c12_i32 = arith.constant 12 : i32
    %c8_i32_85 = arith.constant 8 : i32
    %142 = arith.muli %c12_i32, %c8_i32_85 : i32
    %143 = tpu.assume_multiple %142, 8 : i32
    %144 = arith.index_cast %143 : i32 to index
    %c0_86 = arith.constant 0 : index
    %145 = vector.load %arg10[%144, %c0_86] : memref<136x32xf32, #tpu.memory_space<vmem>>, vector<8x32xf32>
    %146 = arith.index_cast %143 : i32 to index
    %c0_87 = arith.constant 0 : index
    %147 = vector.load %arg11[%146, %c0_87] : memref<128x32xf32, #tpu.memory_space<vmem>>, vector<8x32xf32>
    %cst_88 = arith.constant dense<0.000000e+00> : vector<8x32xf32>
    %148 = tpu.matmul %145, %1, %cst_88 {dimension_numbers = #tpu.dot_dimension_numbers<[1], [0], [0], [1], [0, 0, 1, 1], [], []>} : vector<8x32xf32>, vector<32x32xf32>, vector<8x32xf32> -> vector<8x32xf32>
    %149 = arith.addf %147, %148 : vector<8x32xf32>
    %c8_i32_89 = arith.constant 8 : i32
    %150 = arith.addi %143, %c8_i32_89 : i32
    %151 = arith.index_cast %150 : i32 to index
    %c0_90 = arith.constant 0 : index
    %152 = vector.load %arg10[%151, %c0_90] : memref<136x32xf32, #tpu.memory_space<vmem>>, vector<8x32xf32>
    tpu.vector_store %arg10[%151, %c0_90], %149 {strides = array<i32>} : memref<136x32xf32, #tpu.memory_space<vmem>>, vector<8x32xf32>,
    %c13_i32 = arith.constant 13 : i32
    %c8_i32_91 = arith.constant 8 : i32
    %153 = arith.muli %c13_i32, %c8_i32_91 : i32
    %154 = tpu.assume_multiple %153, 8 : i32
    %155 = arith.index_cast %154 : i32 to index
    %c0_92 = arith.constant 0 : index
    %156 = vector.load %arg10[%155, %c0_92] : memref<136x32xf32, #tpu.memory_space<vmem>>, vector<8x32xf32>
    %157 = arith.index_cast %154 : i32 to index
    %c0_93 = arith.constant 0 : index
    %158 = vector.load %arg11[%157, %c0_93] : memref<128x32xf32, #tpu.memory_space<vmem>>, vector<8x32xf32>
    %cst_94 = arith.constant dense<0.000000e+00> : vector<8x32xf32>
    %159 = tpu.matmul %156, %1, %cst_94 {dimension_numbers = #tpu.dot_dimension_numbers<[1], [0], [0], [1], [0, 0, 1, 1], [], []>} : vector<8x32xf32>, vector<32x32xf32>, vector<8x32xf32> -> vector<8x32xf32>
    %160 = arith.addf %158, %159 : vector<8x32xf32>
    %c8_i32_95 = arith.constant 8 : i32
    %161 = arith.addi %154, %c8_i32_95 : i32
    %162 = arith.index_cast %161 : i32 to index
    %c0_96 = arith.constant 0 : index
    %163 = vector.load %arg10[%162, %c0_96] : memref<136x32xf32, #tpu.memory_space<vmem>>, vector<8x32xf32>
    tpu.vector_store %arg10[%162, %c0_96], %160 {strides = array<i32>} : memref<136x32xf32, #tpu.memory_space<vmem>>, vector<8x32xf32>,
    %c14_i32 = arith.constant 14 : i32
    %c8_i32_97 = arith.constant 8 : i32
    %164 = arith.muli %c14_i32, %c8_i32_97 : i32
    %165 = tpu.assume_multiple %164, 8 : i32
    %166 = arith.index_cast %165 : i32 to index
    %c0_98 = arith.constant 0 : index
    %167 = vector.load %arg10[%166, %c0_98] : memref<136x32xf32, #tpu.memory_space<vmem>>, vector<8x32xf32>
    %168 = arith.index_cast %165 : i32 to index
    %c0_99 = arith.constant 0 : index
    %169 = vector.load %arg11[%168, %c0_99] : memref<128x32xf32, #tpu.memory_space<vmem>>, vector<8x32xf32>
    %cst_100 = arith.constant dense<0.000000e+00> : vector<8x32xf32>
    %170 = tpu.matmul %167, %1, %cst_100 {dimension_numbers = #tpu.dot_dimension_numbers<[1], [0], [0], [1], [0, 0, 1, 1], [], []>} : vector<8x32xf32>, vector<32x32xf32>, vector<8x32xf32> -> vector<8x32xf32>
    %171 = arith.addf %169, %170 : vector<8x32xf32>
    %c8_i32_101 = arith.constant 8 : i32
    %172 = arith.addi %165, %c8_i32_101 : i32
    %173 = arith.index_cast %172 : i32 to index
    %c0_102 = arith.constant 0 : index
    %174 = vector.load %arg10[%173, %c0_102] : memref<136x32xf32, #tpu.memory_space<vmem>>, vector<8x32xf32>
    tpu.vector_store %arg10[%173, %c0_102], %171 {strides = array<i32>} : memref<136x32xf32, #tpu.memory_space<vmem>>, vector<8x32xf32>,
    %c15_i32 = arith.constant 15 : i32
    %c8_i32_103 = arith.constant 8 : i32
    %175 = arith.muli %c15_i32, %c8_i32_103 : i32
    %176 = tpu.assume_multiple %175, 8 : i32
    %177 = arith.index_cast %176 : i32 to index
    %c0_104 = arith.constant 0 : index
    %178 = vector.load %arg10[%177, %c0_104] : memref<136x32xf32, #tpu.memory_space<vmem>>, vector<8x32xf32>
    %179 = arith.index_cast %176 : i32 to index
    %c0_105 = arith.constant 0 : index
    %180 = vector.load %arg11[%179, %c0_105] : memref<128x32xf32, #tpu.memory_space<vmem>>, vector<8x32xf32>
    %cst_106 = arith.constant dense<0.000000e+00> : vector<8x32xf32>
    %181 = tpu.matmul %178, %1, %cst_106 {dimension_numbers = #tpu.dot_dimension_numbers<[1], [0], [0], [1], [0, 0, 1, 1], [], []>} : vector<8x32xf32>, vector<32x32xf32>, vector<8x32xf32> -> vector<8x32xf32>
    %182 = arith.addf %180, %181 : vector<8x32xf32>
    %c8_i32_107 = arith.constant 8 : i32
    %183 = arith.addi %176, %c8_i32_107 : i32
    %184 = arith.index_cast %183 : i32 to index
    %c0_108 = arith.constant 0 : index
    %185 = vector.load %arg10[%184, %c0_108] : memref<136x32xf32, #tpu.memory_space<vmem>>, vector<8x32xf32>
    tpu.vector_store %arg10[%184, %c0_108], %182 {strides = array<i32>} : memref<136x32xf32, #tpu.memory_space<vmem>>, vector<8x32xf32>,
    %c16_i32 = arith.constant 16 : i32
    %c0_109 = arith.constant 0 : index
    %c0_110 = arith.constant 0 : index
    %186 = vector.load %arg10[%c0_109, %c0_110] : memref<136x32xf32, #tpu.memory_space<vmem>>, vector<128x32xf32>
    %c0_111 = arith.constant 0 : index
    %c0_112 = arith.constant 0 : index
    %187 = vector.load %arg5[%c0_111, %c0_112] : memref<10x16xf32, #tpu.memory_space<vmem>>, vector<10x16xf32>
    %cst_113 = arith.constant dense<0.000000e+00> : vector<128x16xf32>
    %188 = tpu.matmul %0, %187, %cst_113 {dimension_numbers = #tpu.dot_dimension_numbers<[1], [0], [0], [1], [0, 0, 1, 1], [], []>} : vector<128x10xf32>, vector<10x16xf32>, vector<128x16xf32> -> vector<128x16xf32>
    %c0_114 = arith.constant 0 : index
    %c0_115 = arith.constant 0 : index
    %189 = vector.load %arg6[%c0_114, %c0_115] : memref<32x16xf32, #tpu.memory_space<vmem>>, vector<32x16xf32>
    %cst_116 = arith.constant dense<0.000000e+00> : vector<128x16xf32>
    %190 = tpu.matmul %186, %189, %cst_116 {dimension_numbers = #tpu.dot_dimension_numbers<[1], [0], [0], [1], [0, 0, 1, 1], [], []>} : vector<128x32xf32>, vector<32x16xf32>, vector<128x16xf32> -> vector<128x16xf32>
    %191 = arith.addf %188, %190 : vector<128x16xf32>
    %c0_117 = arith.constant 0 : index
    %c0_118 = arith.constant 0 : index
    %192 = vector.load %arg7[%c0_117, %c0_118] : memref<1x16xf32, #tpu.memory_space<vmem>>, vector<1x16xf32>
    %193 = vector.broadcast %192 : vector<1x16xf32> to vector<128x16xf32>
    %194 = arith.addf %191, %193 : vector<128x16xf32>
    %cst_119 = arith.constant dense<0xFF800000> : vector<128xf32>
    %195 = vector.multi_reduction <maximumf>, %194, %cst_119 [1] : vector<128x16xf32> to vector<128xf32>
    %196 = vector.shape_cast %195 : vector<128xf32> to vector<128x1xf32>
    %197 = vector.broadcast %196 : vector<128x1xf32> to vector<128x16xf32>
    %198 = arith.subf %194, %197 : vector<128x16xf32>
    %199 = math.exp %198 : vector<128x16xf32>
    %cst_120 = arith.constant dense<0.000000e+00> : vector<128xf32>
    %200 = vector.multi_reduction <add>, %199, %cst_120 [1] : vector<128x16xf32> to vector<128xf32>
    %201 = vector.shape_cast %200 : vector<128xf32> to vector<128x1xf32>
    %202 = math.log %201 : vector<128x1xf32>
    %203 = arith.addf %196, %202 : vector<128x1xf32>
    %204 = vector.broadcast %203 : vector<128x1xf32> to vector<128x16xf32>
    %205 = arith.subf %194, %204 : vector<128x16xf32>
    %c0_121 = arith.constant 0 : index
    %c0_122 = arith.constant 0 : index
    %206 = vector.load %arg8[%c0_121, %c0_122] : memref<128x16xf32, #tpu.memory_space<vmem>>, vector<128x16xf32>
    tpu.vector_store %arg8[%c0_121, %c0_122], %205 {strides = array<i32>} : memref<128x16xf32, #tpu.memory_space<vmem>>, vector<128x16xf32>,
    %c128 = arith.constant 128 : index
    %c0_123 = arith.constant 0 : index
    %207 = vector.load %arg10[%c128, %c0_123] : memref<136x32xf32, #tpu.memory_space<vmem>>, vector<8x32xf32>
    %c0_124 = arith.constant 0 : index
    %c0_125 = arith.constant 0 : index
    %208 = vector.load %arg9[%c0_124, %c0_125] : memref<8x32xf32, #tpu.memory_space<vmem>>, vector<8x32xf32>
    tpu.vector_store %arg9[%c0_124, %c0_125], %207 {strides = array<i32>} : memref<8x32xf32, #tpu.memory_space<vmem>>, vector<8x32xf32>,
    return
  }
}

</mosaic_0001>

<llo_original>
// kernel: rnn_sequence.1
$region0: #{rnn_sequence.1}
  #allocation0 [shape = 'u32[]', space=smem, size = 0x4, offset = 0x4, fixed_abs, tag = 'smem constant byte address 0x4 - core index']
  #allocation1 [shape = 'u32[144,128]{1,0:T(1,128)}', space=vmem, size = 0x12000, scoped, tag = 'internal scratch']
  #allocation2 [shape = 'f32[136,32]{1,0:T(8,128)}', space=vmem, size = 0x11000, scoped, tag = 'scratch operand']
  #allocation3 [shape = 'f32[128,32]{1,0:T(8,128)}', space=vmem, size = 0x10000, scoped, tag = 'scratch operand']
  %s0 = inlined_call_operand.vmem [shape: f32[128,10], index: 0, kind: input, shape index: {}]
  %s1 = inlined_call_operand.vmem [shape: f32[8,32], index: 1, kind: input, shape index: {}, may-alias: {1,9}]
  %s2 = inlined_call_operand.vmem [shape: f32[10,32], index: 2, kind: input, shape index: {}]
  %s3 = inlined_call_operand.vmem [shape: f32[32,32], index: 3, kind: input, shape index: {}]
  %s4 = inlined_call_operand.vmem [shape: f32[1,32], index: 4, kind: input, shape index: {}]
  %s5 = inlined_call_operand.vmem [shape: f32[10,16], index: 5, kind: input, shape index: {}]
  %s6 = inlined_call_operand.vmem [shape: f32[32,16], index: 6, kind: input, shape index: {}]
  %s7 = inlined_call_operand.vmem [shape: f32[1,16], index: 7, kind: input, shape index: {}]
  %s8 = inlined_call_operand.hbm [shape: f32[128,16], index: 8, kind: output, shape index: {0}]
  %s9 = inlined_call_operand.vmem [shape: f32[8,32], index: 9, kind: output, shape index: {1}, may-alias: {1,9}]
  %10 = xla_tuple %s8, %s9
  %s11 = sld [smem:[#allocation0]]
  $region50: #{rnn_sequence.1} parent=0
    _
  %s13 = ssub.s32 1, %s11
  %s14 = scalar_select 0, %s13, %s11
  $region1: #{rnn_sequence.1} parent=0
    #allocation4 [shape = 'u8[65536]{0}', space=vmem, size = 0x10000, scoped, tag = 'output window, operand 0, single buffered']
    #allocation5 [shape = 's32[1]{0}', space=sflag, size = 0x4, scoped, tag = 'scoped memory for rnn_sequence.1']
    %15 = vsyncpa [#allocation5], 0
    // Predicated region
    $region2: #{rnn_sequence.1} parent=1 // pred_check
      _
    $region3: #{rnn_sequence.1} parent=1 // pred_check_branch
      %17 = sbr.rel (0) target = $region5
    $region4: #{rnn_sequence.1} parent=1 // pred_region
      _
    $region5: #{rnn_sequence.1} parent=1 // pred_fallthru
      _
    // Predicated region
    $region6: #{rnn_sequence.1} parent=1 // pred_check
      _
    $region7: #{rnn_sequence.1} parent=1 // pred_check_branch
      %19 = sbr.rel (0) target = $region9
    $region8: #{rnn_sequence.1} parent=1 // pred_region
      _
    $region9: #{rnn_sequence.1} parent=1 // pred_fallthru
      _
    // Predicated region
    $region10: #{rnn_sequence.1} parent=1 // pred_check
      _
    $region11: #{rnn_sequence.1} parent=1 // pred_check_branch
      %21 = sbr.rel (0) target = $region13
    $region12: #{rnn_sequence.1} parent=1 // pred_region
      _
    $region13: #{rnn_sequence.1} parent=1 // pred_fallthru
      _
    // Predicated region
    $region14: #{rnn_sequence.1} parent=1 // pred_check
      _
    $region15: #{rnn_sequence.1} parent=1 // pred_check_branch
      %23 = sbr.rel (0) target = $region17
    $region16: #{rnn_sequence.1} parent=1 // pred_region
      _
    $region17: #{rnn_sequence.1} parent=1 // pred_fallthru
      _
    // Predicated region
    $region18: #{rnn_sequence.1} parent=1 // pred_check
      _
    $region19: #{rnn_sequence.1} parent=1 // pred_check_branch
      %25 = sbr.rel (0) target = $region21
    $region20: #{rnn_sequence.1} parent=1 // pred_region
      _
    $region21: #{rnn_sequence.1} parent=1 // pred_fallthru
      _
    // Predicated region
    $region22: #{rnn_sequence.1} parent=1 // pred_check
      _
    $region23: #{rnn_sequence.1} parent=1 // pred_check_branch
      %27 = sbr.rel (0) target = $region25
    $region24: #{rnn_sequence.1} parent=1 // pred_region
      _
    $region25: #{rnn_sequence.1} parent=1 // pred_fallthru
      _
    // Predicated region
    $region26: #{rnn_sequence.1} parent=1 // pred_check
      _
    $region27: #{rnn_sequence.1} parent=1 // pred_check_branch
      %29 = sbr.rel (0) target = $region29
    $region28: #{rnn_sequence.1} parent=1 // pred_region
      _
    $region29: #{rnn_sequence.1} parent=1 // pred_fallthru
      _
    // Predicated region
    $region30: #{rnn_sequence.1} parent=1 // pred_check
      _
    $region31: #{rnn_sequence.1} parent=1 // pred_check_branch
      %31 = sbr.rel (0) target = $region33
    $region32: #{rnn_sequence.1} parent=1 // pred_region
      _
    $region33: #{rnn_sequence.1} parent=1 // pred_fallthru
      _
    %v32 = vld [vmem:[%s0] sm:$0xff]
    %v33 = vld [vmem:[%s0 + $0x8] sm:$0xff]
    %v34 = vld [vmem:[%s0 + $0x10] sm:$0xff]
    %v35 = vld [vmem:[%s0 + $0x18] sm:$0xff]
    %v36 = vld [vmem:[%s0 + $0x20] sm:$0xff]
    %v37 = vld [vmem:[%s0 + $0x28] sm:$0xff]
    %v38 = vld [vmem:[%s0 + $0x30] sm:$0xff]
    %v39 = vld [vmem:[%s0 + $0x38] sm:$0xff]
    %v40 = vld [vmem:[%s0 + $0x40] sm:$0xff]
    %v41 = vld [vmem:[%s0 + $0x48] sm:$0xff]
    %v42 = vld [vmem:[%s0 + $0x50] sm:$0xff]
    %v43 = vld [vmem:[%s0 + $0x58] sm:$0xff]
    %v44 = vld [vmem:[%s0 + $0x60] sm:$0xff]
    %v45 = vld [vmem:[%s0 + $0x68] sm:$0xff]
    %v46 = vld [vmem:[%s0 + $0x70] sm:$0xff]
    %v47 = vld [vmem:[%s0 + $0x78] sm:$0xff]
    %v48 = vld [vmem:[%s3] sm:$0xff]
    %v49 = vld [vmem:[%s3 + $0x8] sm:$0xff]
    %v50 = vld [vmem:[%s3 + $0x10] sm:$0xff]
    %v51 = vld [vmem:[%s3 + $0x18] sm:$0xff]
    %v52 = vld [vmem:[%s2] sm:$0xff]
    %v53 = vld [vmem:[%s2 + $0x8] sm:$0x3]
    %v54 = vld [vmem:[%s4] sm:$0x1]
    %v56 = vlaneseq
    %v57 = vshrl.u32 %v56, 7
    %v58 = vsub.s32 0, %v57
    %v59 = vrot.slane %v54, %v58
    %vm61 = vcmask 80896
    %v63 = vsel %vm61, %v32, 0
    %v66 = vsel %vm61, %v33, 0
    %v69 = vsel %vm61, %v34, 0
    %v72 = vsel %vm61, %v35, 0
    %v75 = vsel %vm61, %v36, 0
    %v78 = vsel %vm61, %v37, 0
    %v81 = vsel %vm61, %v38, 0
    %v84 = vsel %vm61, %v39, 0
    %v87 = vsel %vm61, %v40, 0
    %v90 = vsel %vm61, %v41, 0
    %v93 = vsel %vm61, %v42, 0
    %v96 = vsel %vm61, %v43, 0
    %v99 = vsel %vm61, %v44, 0
    %v102 = vsel %vm61, %v45, 0
    %v105 = vsel %vm61, %v46, 0
    %v108 = vsel %vm61, %v47, 0
    %vm110 = vcmask 1041408
    %v112 = vsel %vm110, %v53, 0
    %114 = vmatprep.subr.mxu0 0.0
    %115 = vmatpush1.msra.mxu0 %v52
    %116 = vmatprep.subr.mxu0 0.0
    %117 = vmatpush1.msra.mxu0 %v112
    %118 = vmatprep.subr.mxu0 0.0
    %119 = vmatpush1.msra.mxu0 0.0
    %120 = vmatprep.subr.mxu0 0.0
    %121 = vmatpush1.msra.mxu0 0.0
    %122 = vmatprep.subr.mxu0 0.0
    %123 = vmatpush1.msra.mxu0 0.0
    %124 = vmatprep.subr.mxu0 0.0
    %125 = vmatpush1.msra.mxu0 0.0
    %126 = vmatprep.subr.mxu0 0.0
    %127 = vmatpush1.msra.mxu0 0.0
    %128 = vmatprep.subr.mxu0 0.0
    %129 = vmatpush1.msra.mxu0 0.0
    %130 = vmatprep.subr.mxu0 0.0
    %131 = vmatpush1.msra.mxu0 0.0
    %132 = vmatprep.subr.mxu0 0.0
    %133 = vmatpush1.msra.mxu0 0.0
    %134 = vmatprep.subr.mxu0 0.0
    %135 = vmatpush1.msra.mxu0 0.0
    %136 = vmatprep.subr.mxu0 0.0
    %137 = vmatpush1.msra.mxu0 0.0
    %138 = vmatprep.subr.mxu0 0.0
    %139 = vmatpush1.msra.mxu0 0.0
    %140 = vmatprep.subr.mxu0 0.0
    %141 = vmatpush1.msra.mxu0 0.0
    %142 = vmatprep.subr.mxu0 0.0
    %143 = vmatpush1.msra.mxu0 0.0
    %144 = vmatprep.subr.mxu0 0.0
    %145 = vmatpush1.msra.mxu0 0.0
    %146 = vmatprep.subr.mxu0 0.0
    %147 = vmatpush1.msra.mxu0 0.0
    %148 = vmatprep.subr.mxu0 0.0
    %149 = vmatpush1.msra.mxu0 0.0
    %150 = vmatprep.subr.mxu0 0.0
    %151 = vmatpush1.msra.mxu0 0.0
    %152 = vmatprep.subr.mxu0 0.0
    %153 = vmatpush1.msra.mxu0 0.0
    %154 = vmatprep.subr.mxu0 0.0
    %155 = vmatpush1.msra.mxu0 0.0
    %156 = vmatprep.subr.mxu0 0.0
    %157 = vmatpush1.msra.mxu0 0.0
    %158 = vmatprep.subr.mxu0 0.0
    %159 = vmatpush1.msra.mxu0 0.0
    %160 = vmatprep.subr.mxu0 0.0
    %161 = vmatpush1.msra.mxu0 0.0
    %162 = vmatprep.subr.mxu0 0.0
    %163 = vmatpush1.msra.mxu0 0.0
    %164 = vmatprep.subr.mxu0 0.0
    %165 = vmatpush1.msra.mxu0 0.0
    %166 = vmatprep.subr.mxu0 0.0
    %167 = vmatpush1.msra.mxu0 0.0
    %168 = vmatprep.subr.mxu0 0.0
    %169 = vmatpush1.msra.mxu0 0.0
    %170 = vmatprep.subr.mxu0 0.0
    %171 = vmatpush1.msra.mxu0 0.0
    %172 = vmatprep.subr.mxu0 0.0
    %173 = vmatpush1.msra.mxu0 0.0
    %174 = vmatprep.subr.mxu0 0.0
    %175 = vmatpush1.msra.mxu0 0.0
    %176 = vmatprep.subr.mxu0 0.0
    %177 = vmatpush1.msra.mxu0 0.0
    %178 = vmatprep.mubr.f32.mxu0 0.0
    %179 = vmatmul.mubr.f32.gmra.mrb[0].mxu0 %v63
    %v180 = vpop.f32.mrb[0].mxu0
    %v181 = vadd.f32 %v59, %v180
    %v182 = vpop.f32.mrb[0].mxu0
    %183 = vmatprep.mubr.f32.mxu0 0.0
    %184 = vmatmul.mubr.f32.gmra.mrb[0].mxu0 %v66
    %v185 = vpop.f32.mrb[0].mxu0
    %v186 = vadd.f32 %v59, %v185
    %v187 = vpop.f32.mrb[0].mxu0
    %188 = vmatprep.mubr.f32.mxu0 0.0
    %189 = vmatmul.mubr.f32.gmra.mrb[0].mxu0 %v69
    %v190 = vpop.f32.mrb[0].mxu0
    %v191 = vadd.f32 %v59, %v190
    %v192 = vpop.f32.mrb[0].mxu0
    %193 = vmatprep.mubr.f32.mxu0 0.0
    %194 = vmatmul.mubr.f32.gmra.mrb[0].mxu0 %v72
    %v195 = vpop.f32.mrb[0].mxu0
    %v196 = vadd.f32 %v59, %v195
    %v197 = vpop.f32.mrb[0].mxu0
    %198 = vmatprep.mubr.f32.mxu0 0.0
    %199 = vmatmul.mubr.f32.gmra.mrb[0].mxu0 %v75
    %v200 = vpop.f32.mrb[0].mxu0
    %v201 = vadd.f32 %v59, %v200
    %v202 = vpop.f32.mrb[0].mxu0
    %203 = vmatprep.mubr.f32.mxu0 0.0
    %204 = vmatmul.mubr.f32.gmra.mrb[0].mxu0 %v78
    %v205 = vpop.f32.mrb[0].mxu0
    %v206 = vadd.f32 %v59, %v205
    %v207 = vpop.f32.mrb[0].mxu0
    %208 = vmatprep.mubr.f32.mxu0 0.0
    %209 = vmatmul.mubr.f32.gmra.mrb[0].mxu0 %v81
    %v210 = vpop.f32.mrb[0].mxu0
    %v211 = vadd.f32 %v59, %v210
    %v212 = vpop.f32.mrb[0].mxu0
    %213 = vmatprep.mubr.f32.mxu0 0.0
    %214 = vmatmul.mubr.f32.gmra.mrb[0].mxu0 %v84
    %v215 = vpop.f32.mrb[0].mxu0
    %v216 = vadd.f32 %v59, %v215
    %v217 = vpop.f32.mrb[0].mxu0
    %218 = vmatprep.mubr.f32.mxu0 0.0
    %219 = vmatmul.mubr.f32.gmra.mrb[0].mxu0 %v87
    %v220 = vpop.f32.mrb[0].mxu0
    %v221 = vadd.f32 %v59, %v220
    %v222 = vpop.f32.mrb[0].mxu0
    %223 = vmatprep.mubr.f32.mxu0 0.0
    %224 = vmatmul.mubr.f32.gmra.mrb[0].mxu0 %v90
    %v225 = vpop.f32.mrb[0].mxu0
    %v226 = vadd.f32 %v59, %v225
    %v227 = vpop.f32.mrb[0].mxu0
    %228 = vmatprep.mubr.f32.mxu0 0.0
    %229 = vmatmul.mubr.f32.gmra.mrb[0].mxu0 %v93
    %v230 = vpop.f32.mrb[0].mxu0
    %v231 = vadd.f32 %v59, %v230
    %v232 = vpop.f32.mrb[0].mxu0
    %233 = vmatprep.mubr.f32.mxu0 0.0
    %234 = vmatmul.mubr.f32.gmra.mrb[0].mxu0 %v96
    %v235 = vpop.f32.mrb[0].mxu0
    %v236 = vadd.f32 %v59, %v235
    %v237 = vpop.f32.mrb[0].mxu0
    %238 = vmatprep.mubr.f32.mxu0 0.0
    %239 = vmatmul.mubr.f32.gmra.mrb[0].mxu0 %v99
    %v240 = vpop.f32.mrb[0].mxu0
    %v241 = vadd.f32 %v59, %v240
    %v242 = vpop.f32.mrb[0].mxu0
    %243 = vmatprep.mubr.f32.mxu0 0.0
    %244 = vmatmul.mubr.f32.gmra.mrb[0].mxu0 %v102
    %v245 = vpop.f32.mrb[0].mxu0
    %v246 = vadd.f32 %v59, %v245
    %v247 = vpop.f32.mrb[0].mxu0
    %248 = vmatprep.mubr.f32.mxu0 0.0
    %249 = vmatmul.mubr.f32.gmra.mrb[0].mxu0 %v105
    %v250 = vpop.f32.mrb[0].mxu0
    %v251 = vadd.f32 %v59, %v250
    %v252 = vpop.f32.mrb[0].mxu0
    %253 = vmatprep.mubr.f32.mxu0 0.0
    %254 = vmatmul.mubr.f32.gmra.mrb[0].mxu0 %v108
    %v255 = vpop.f32.mrb[0].mxu0
    %v256 = vadd.f32 %v59, %v255
    %v257 = vpop.f32.mrb[0].mxu0
    %258 = vdwg.mxu0
    %vm259 = vcmask 261120
    %260 = vst.msk [vmem:[#allocation3] sm:$0xff] %vm259, %v181
    %261 = vst.msk [vmem:[#allocation3 + $0x8] sm:$0xff] %vm259, %v186
    %262 = vst.msk [vmem:[#allocation3 + $0x10] sm:$0xff] %vm259, %v191
    %263 = vst.msk [vmem:[#allocation3 + $0x18] sm:$0xff] %vm259, %v196
    %264 = vst.msk [vmem:[#allocation3 + $0x20] sm:$0xff] %vm259, %v201
    %265 = vst.msk [vmem:[#allocation3 + $0x28] sm:$0xff] %vm259, %v206
    %266 = vst.msk [vmem:[#allocation3 + $0x30] sm:$0xff] %vm259, %v211
    %267 = vst.msk [vmem:[#allocation3 + $0x38] sm:$0xff] %vm259, %v216
    %268 = vst.msk [vmem:[#allocation3 + $0x40] sm:$0xff] %vm259, %v221
    %269 = vst.msk [vmem:[#allocation3 + $0x48] sm:$0xff] %vm259, %v226
    %270 = vst.msk [vmem:[#allocation3 + $0x50] sm:$0xff] %vm259, %v231
    %271 = vst.msk [vmem:[#allocation3 + $0x58] sm:$0xff] %vm259, %v236
    %272 = vst.msk [vmem:[#allocation3 + $0x60] sm:$0xff] %vm259, %v241
    %273 = vst.msk [vmem:[#allocation3 + $0x68] sm:$0xff] %vm259, %v246
    %274 = vst.msk [vmem:[#allocation3 + $0x70] sm:$0xff] %vm259, %v251
    %275 = vst.msk [vmem:[#allocation3 + $0x78] sm:$0xff] %vm259, %v256
    %v276 = vld [vmem:[%s1] sm:$0xff]
    %277 = vst.msk [vmem:[#allocation2] sm:$0xff] %vm259, %v276
    %v278 = vld [vmem:[#allocation2] sm:$0xff]
    %v279 = vld [vmem:[#allocation3] sm:$0xff]
    %v281 = vsel %vm259, %v278, 0
    %283 = vmatprep.subr.mxu0 0.0
    %284 = vmatpush1.msra.mxu0 %v48
    %285 = vmatprep.subr.mxu0 0.0
    %286 = vmatpush1.msra.mxu0 %v49
    %287 = vmatprep.subr.mxu0 0.0
    %288 = vmatpush1.msra.mxu0 %v50
    %289 = vmatprep.subr.mxu0 0.0
    %290 = vmatpush1.msra.mxu0 %v51
    %291 = vmatprep.subr.mxu0 0.0
    %292 = vmatpush1.msra.mxu0 0.0
    %293 = vmatprep.subr.mxu0 0.0
    %294 = vmatpush1.msra.mxu0 0.0
    %295 = vmatprep.subr.mxu0 0.0
    %296 = vmatpush1.msra.mxu0 0.0
    %297 = vmatprep.subr.mxu0 0.0
    %298 = vmatpush1.msra.mxu0 0.0
    %299 = vmatprep.subr.mxu0 0.0
    %300 = vmatpush1.msra.mxu0 0.0
    %301 = vmatprep.subr.mxu0 0.0
    %302 = vmatpush1.msra.mxu0 0.0
    %303 = vmatprep.subr.mxu0 0.0
    %304 = vmatpush1.msra.mxu0 0.0
    %305 = vmatprep.subr.mxu0 0.0
    %306 = vmatpush1.msra.mxu0 0.0
    %307 = vmatprep.subr.mxu0 0.0
    %308 = vmatpush1.msra.mxu0 0.0
    %309 = vmatprep.subr.mxu0 0.0
    %310 = vmatpush1.msra.mxu0 0.0
    %311 = vmatprep.subr.mxu0 0.0
    %312 = vmatpush1.msra.mxu0 0.0
    %313 = vmatprep.subr.mxu0 0.0
    %314 = vmatpush1.msra.mxu0 0.0
    %315 = vmatprep.subr.mxu0 0.0
    %316 = vmatpush1.msra.mxu0 0.0
    %317 = vmatprep.subr.mxu0 0.0
    %318 = vmatpush1.msra.mxu0 0.0
    %319 = vmatprep.subr.mxu0 0.0
    %320 = vmatpush1.msra.mxu0 0.0
    %321 = vmatprep.subr.mxu0 0.0
    %322 = vmatpush1.msra.mxu0 0.0
    %323 = vmatprep.subr.mxu0 0.0
    %324 = vmatpush1.msra.mxu0 0.0
    %325 = vmatprep.subr.mxu0 0.0
    %326 = vmatpush1.msra.mxu0 0.0
    %327 = vmatprep.subr.mxu0 0.0
    %328 = vmatpush1.msra.mxu0 0.0
    %329 = vmatprep.subr.mxu0 0.0
    %330 = vmatpush1.msra.mxu0 0.0
    %331 = vmatprep.subr.mxu0 0.0
    %332 = vmatpush1.msra.mxu0 0.0
    %333 = vmatprep.subr.mxu0 0.0
    %334 = vmatpush1.msra.mxu0 0.0
    %335 = vmatprep.subr.mxu0 0.0
    %336 = vmatpush1.msra.mxu0 0.0
    %337 = vmatprep.subr.mxu0 0.0
    %338 = vmatpush1.msra.mxu0 0.0
    %339 = vmatprep.subr.mxu0 0.0
    %340 = vmatpush1.msra.mxu0 0.0
    %341 = vmatprep.subr.mxu0 0.0
    %342 = vmatpush1.msra.mxu0 0.0
    %343 = vmatprep.subr.mxu0 0.0
    %344 = vmatpush1.msra.mxu0 0.0
    %345 = vmatprep.subr.mxu0 0.0
    %346 = vmatpush1.msra.mxu0 0.0
    %347 = vmatprep.mubr.f32.mxu0 0.0
    %348 = vmatmul.mubr.f32.gmra.mrb[0].mxu0 %v281
    %v349 = vpop.f32.mrb[0].mxu0
    %v350 = vadd.f32 0.0, %v349
    %v351 = vpop.f32.mrb[0].mxu0
    %352 = vdwg.mxu0
    %v353 = vadd.f32 %v279, %v350
    %s354 = sadd.s32 0, 8
    %s355 = scalar_lea.vmem [#allocation2], %s354
    %356 = vst.msk [vmem:[%s355] sm:$0xff] %vm259, %v353
    %s357 = scalar_lea.vmem [#allocation2], 8
    %v358 = vld [vmem:[%s357] sm:$0xff]
    %s359 = scalar_lea.vmem [#allocation3], 8
    %v360 = vld [vmem:[%s359] sm:$0xff]
    %v362 = vsel %vm259, %v358, 0
    %364 = vmatprep.subr.mxu0 0.0
    %365 = vmatpush1.msra.mxu0 %v48
    %366 = vmatprep.subr.mxu0 0.0
    %367 = vmatpush1.msra.mxu0 %v49
    %368 = vmatprep.subr.mxu0 0.0
    %369 = vmatpush1.msra.mxu0 %v50
    %370 = vmatprep.subr.mxu0 0.0
    %371 = vmatpush1.msra.mxu0 %v51
    %372 = vmatprep.subr.mxu0 0.0
    %373 = vmatpush1.msra.mxu0 0.0
    %374 = vmatprep.subr.mxu0 0.0
    %375 = vmatpush1.msra.mxu0 0.0
    %376 = vmatprep.subr.mxu0 0.0
    %377 = vmatpush1.msra.mxu0 0.0
    %378 = vmatprep.subr.mxu0 0.0
    %379 = vmatpush1.msra.mxu0 0.0
    %380 = vmatprep.subr.mxu0 0.0
    %381 = vmatpush1.msra.mxu0 0.0
    %382 = vmatprep.subr.mxu0 0.0
    %383 = vmatpush1.msra.mxu0 0.0
    %384 = vmatprep.subr.mxu0 0.0
    %385 = vmatpush1.msra.mxu0 0.0
    %386 = vmatprep.subr.mxu0 0.0
    %387 = vmatpush1.msra.mxu0 0.0
    %388 = vmatprep.subr.mxu0 0.0
    %389 = vmatpush1.msra.mxu0 0.0
    %390 = vmatprep.subr.mxu0 0.0
    %391 = vmatpush1.msra.mxu0 0.0
    %392 = vmatprep.subr.mxu0 0.0
    %393 = vmatpush1.msra.mxu0 0.0
    %394 = vmatprep.subr.mxu0 0.0
    %395 = vmatpush1.msra.mxu0 0.0
    %396 = vmatprep.subr.mxu0 0.0
    %397 = vmatpush1.msra.mxu0 0.0
    %398 = vmatprep.subr.mxu0 0.0
    %399 = vmatpush1.msra.mxu0 0.0
    %400 = vmatprep.subr.mxu0 0.0
    %401 = vmatpush1.msra.mxu0 0.0
    %402 = vmatprep.subr.mxu0 0.0
    %403 = vmatpush1.msra.mxu0 0.0
    %404 = vmatprep.subr.mxu0 0.0
    %405 = vmatpush1.msra.mxu0 0.0
    %406 = vmatprep.subr.mxu0 0.0
    %407 = vmatpush1.msra.mxu0 0.0
    %408 = vmatprep.subr.mxu0 0.0
    %409 = vmatpush1.msra.mxu0 0.0
    %410 = vmatprep.subr.mxu0 0.0
    %411 = vmatpush1.msra.mxu0 0.0
    %412 = vmatprep.subr.mxu0 0.0
    %413 = vmatpush1.msra.mxu0 0.0
    %414 = vmatprep.subr.mxu0 0.0
    %415 = vmatpush1.msra.mxu0 0.0
    %416 = vmatprep.subr.mxu0 0.0
    %417 = vmatpush1.msra.mxu0 0.0
    %418 = vmatprep.subr.mxu0 0.0
    %419 = vmatpush1.msra.mxu0 0.0
    %420 = vmatprep.subr.mxu0 0.0
    %421 = vmatpush1.msra.mxu0 0.0
    %422 = vmatprep.subr.mxu0 0.0
    %423 = vmatpush1.msra.mxu0 0.0
    %424 = vmatprep.subr.mxu0 0.0
    %425 = vmatpush1.msra.mxu0 0.0
    %426 = vmatprep.subr.mxu0 0.0
    %427 = vmatpush1.msra.mxu0 0.0
    %428 = vmatprep.mubr.f32.mxu0 0.0
    %429 = vmatmul.mubr.f32.gmra.mrb[0].mxu0 %v362
    %v430 = vpop.f32.mrb[0].mxu0
    %v431 = vadd.f32 0.0, %v430
    %v432 = vpop.f32.mrb[0].mxu0
    %433 = vdwg.mxu0
    %v434 = vadd.f32 %v360, %v431
    %s435 = sadd.s32 8, 8
    %s436 = scalar_lea.vmem [#allocation2], %s435
    %437 = vst.msk [vmem:[%s436] sm:$0xff] %vm259, %v434
    %s438 = scalar_lea.vmem [#allocation2], 16
    %v439 = vld [vmem:[%s438] sm:$0xff]
    %s440 = scalar_lea.vmem [#allocation3], 16
    %v441 = vld [vmem:[%s440] sm:$0xff]
    %v443 = vsel %vm259, %v439, 0
    %445 = vmatprep.subr.mxu0 0.0
    %446 = vmatpush1.msra.mxu0 %v48
    %447 = vmatprep.subr.mxu0 0.0
    %448 = vmatpush1.msra.mxu0 %v49
    %449 = vmatprep.subr.mxu0 0.0
    %450 = vmatpush1.msra.mxu0 %v50
    %451 = vmatprep.subr.mxu0 0.0
    %452 = vmatpush1.msra.mxu0 %v51
    %453 = vmatprep.subr.mxu0 0.0
    %454 = vmatpush1.msra.mxu0 0.0
    %455 = vmatprep.subr.mxu0 0.0
    %456 = vmatpush1.msra.mxu0 0.0
    %457 = vmatprep.subr.mxu0 0.0
    %458 = vmatpush1.msra.mxu0 0.0
    %459 = vmatprep.subr.mxu0 0.0
    %460 = vmatpush1.msra.mxu0 0.0
    %461 = vmatprep.subr.mxu0 0.0
    %462 = vmatpush1.msra.mxu0 0.0
    %463 = vmatprep.subr.mxu0 0.0
    %464 = vmatpush1.msra.mxu0 0.0
    %465 = vmatprep.subr.mxu0 0.0
    %466 = vmatpush1.msra.mxu0 0.0
    %467 = vmatprep.subr.mxu0 0.0
    %468 = vmatpush1.msra.mxu0 0.0
    %469 = vmatprep.subr.mxu0 0.0
    %470 = vmatpush1.msra.mxu0 0.0
    %471 = vmatprep.subr.mxu0 0.0
    %472 = vmatpush1.msra.mxu0 0.0
    %473 = vmatprep.subr.mxu0 0.0
    %474 = vmatpush1.msra.mxu0 0.0
    %475 = vmatprep.subr.mxu0 0.0
    %476 = vmatpush1.msra.mxu0 0.0
    %477 = vmatprep.subr.mxu0 0.0
    %478 = vmatpush1.msra.mxu0 0.0
    %479 = vmatprep.subr.mxu0 0.0
    %480 = vmatpush1.msra.mxu0 0.0
    %481 = vmatprep.subr.mxu0 0.0
    %482 = vmatpush1.msra.mxu0 0.0
    %483 = vmatprep.subr.mxu0 0.0
    %484 = vmatpush1.msra.mxu0 0.0
    %485 = vmatprep.subr.mxu0 0.0
    %486 = vmatpush1.msra.mxu0 0.0
    %487 = vmatprep.subr.mxu0 0.0
    %488 = vmatpush1.msra.mxu0 0.0
    %489 = vmatprep.subr.mxu0 0.0
    %490 = vmatpush1.msra.mxu0 0.0
    %491 = vmatprep.subr.mxu0 0.0
    %492 = vmatpush1.msra.mxu0 0.0
    %493 = vmatprep.subr.mxu0 0.0
    %494 = vmatpush1.msra.mxu0 0.0
    %495 = vmatprep.subr.mxu0 0.0
    %496 = vmatpush1.msra.mxu0 0.0
    %497 = vmatprep.subr.mxu0 0.0
    %498 = vmatpush1.msra.mxu0 0.0
    %499 = vmatprep.subr.mxu0 0.0
    %500 = vmatpush1.msra.mxu0 0.0
    %501 = vmatprep.subr.mxu0 0.0
    %502 = vmatpush1.msra.mxu0 0.0
    %503 = vmatprep.subr.mxu0 0.0
    %504 = vmatpush1.msra.mxu0 0.0
    %505 = vmatprep.subr.mxu0 0.0
    %506 = vmatpush1.msra.mxu0 0.0
    %507 = vmatprep.subr.mxu0 0.0
    %508 = vmatpush1.msra.mxu0 0.0
    %509 = vmatprep.mubr.f32.mxu0 0.0
    %510 = vmatmul.mubr.f32.gmra.mrb[0].mxu0 %v443
    %v511 = vpop.f32.mrb[0].mxu0
    %v512 = vadd.f32 0.0, %v511
    %v513 = vpop.f32.mrb[0].mxu0
    %514 = vdwg.mxu0
    %v515 = vadd.f32 %v441, %v512
    %s516 = sadd.s32 16, 8
    %s517 = scalar_lea.vmem [#allocation2], %s516
    %518 = vst.msk [vmem:[%s517] sm:$0xff] %vm259, %v515
    %s519 = scalar_lea.vmem [#allocation2], 24
    %v520 = vld [vmem:[%s519] sm:$0xff]
    %s521 = scalar_lea.vmem [#allocation3], 24
    %v522 = vld [vmem:[%s521] sm:$0xff]
    %v524 = vsel %vm259, %v520, 0
    %526 = vmatprep.subr.mxu0 0.0
    %527 = vmatpush1.msra.mxu0 %v48
    %528 = vmatprep.subr.mxu0 0.0
    %529 = vmatpush1.msra.mxu0 %v49
    %530 = vmatprep.subr.mxu0 0.0
    %531 = vmatpush1.msra.mxu0 %v50
    %532 = vmatprep.subr.mxu0 0.0
    %533 = vmatpush1.msra.mxu0 %v51
    %534 = vmatprep.subr.mxu0 0.0
    %535 = vmatpush1.msra.mxu0 0.0
    %536 = vmatprep.subr.mxu0 0.0
    %537 = vmatpush1.msra.mxu0 0.0
    %538 = vmatprep.subr.mxu0 0.0
    %539 = vmatpush1.msra.mxu0 0.0
    %540 = vmatprep.subr.mxu0 0.0
    %541 = vmatpush1.msra.mxu0 0.0
    %542 = vmatprep.subr.mxu0 0.0
    %543 = vmatpush1.msra.mxu0 0.0
    %544 = vmatprep.subr.mxu0 0.0
    %545 = vmatpush1.msra.mxu0 0.0
    %546 = vmatprep.subr.mxu0 0.0
    %547 = vmatpush1.msra.mxu0 0.0
    %548 = vmatprep.subr.mxu0 0.0
    %549 = vmatpush1.msra.mxu0 0.0
    %550 = vmatprep.subr.mxu0 0.0
    %551 = vmatpush1.msra.mxu0 0.0
    %552 = vmatprep.subr.mxu0 0.0
    %553 = vmatpush1.msra.mxu0 0.0
    %554 = vmatprep.subr.mxu0 0.0
    %555 = vmatpush1.msra.mxu0 0.0
    %556 = vmatprep.subr.mxu0 0.0
    %557 = vmatpush1.msra.mxu0 0.0
    %558 = vmatprep.subr.mxu0 0.0
    %559 = vmatpush1.msra.mxu0 0.0
    %560 = vmatprep.subr.mxu0 0.0
    %561 = vmatpush1.msra.mxu0 0.0
    %562 = vmatprep.subr.mxu0 0.0
    %563 = vmatpush1.msra.mxu0 0.0
    %564 = vmatprep.subr.mxu0 0.0
    %565 = vmatpush1.msra.mxu0 0.0
    %566 = vmatprep.subr.mxu0 0.0
    %567 = vmatpush1.msra.mxu0 0.0
    %568 = vmatprep.subr.mxu0 0.0
    %569 = vmatpush1.msra.mxu0 0.0
    %570 = vmatprep.subr.mxu0 0.0
    %571 = vmatpush1.msra.mxu0 0.0
    %572 = vmatprep.subr.mxu0 0.0
    %573 = vmatpush1.msra.mxu0 0.0
    %574 = vmatprep.subr.mxu0 0.0
    %575 = vmatpush1.msra.mxu0 0.0
    %576 = vmatprep.subr.mxu0 0.0
    %577 = vmatpush1.msra.mxu0 0.0
    %578 = vmatprep.subr.mxu0 0.0
    %579 = vmatpush1.msra.mxu0 0.0
    %580 = vmatprep.subr.mxu0 0.0
    %581 = vmatpush1.msra.mxu0 0.0
    %582 = vmatprep.subr.mxu0 0.0
    %583 = vmatpush1.msra.mxu0 0.0
    %584 = vmatprep.subr.mxu0 0.0
    %585 = vmatpush1.msra.mxu0 0.0
    %586 = vmatprep.subr.mxu0 0.0
    %587 = vmatpush1.msra.mxu0 0.0
    %588 = vmatprep.subr.mxu0 0.0
    %589 = vmatpush1.msra.mxu0 0.0
    %590 = vmatprep.mubr.f32.mxu0 0.0
    %591 = vmatmul.mubr.f32.gmra.mrb[0].mxu0 %v524
    %v592 = vpop.f32.mrb[0].mxu0
    %v593 = vadd.f32 0.0, %v592
    %v594 = vpop.f32.mrb[0].mxu0
    %595 = vdwg.mxu0
    %v596 = vadd.f32 %v522, %v593
    %s597 = sadd.s32 24, 8
    %s598 = scalar_lea.vmem [#allocation2], %s597
    %599 = vst.msk [vmem:[%s598] sm:$0xff] %vm259, %v596
    %s600 = scalar_lea.vmem [#allocation2], 32
    %v601 = vld [vmem:[%s600] sm:$0xff]
    %s602 = scalar_lea.vmem [#allocation3], 32
    %v603 = vld [vmem:[%s602] sm:$0xff]
    %v605 = vsel %vm259, %v601, 0
    %607 = vmatprep.subr.mxu0 0.0
    %608 = vmatpush1.msra.mxu0 %v48
    %609 = vmatprep.subr.mxu0 0.0
    %610 = vmatpush1.msra.mxu0 %v49
    %611 = vmatprep.subr.mxu0 0.0
    %612 = vmatpush1.msra.mxu0 %v50
    %613 = vmatprep.subr.mxu0 0.0
    %614 = vmatpush1.msra.mxu0 %v51
    %615 = vmatprep.subr.mxu0 0.0
    %616 = vmatpush1.msra.mxu0 0.0
    %617 = vmatprep.subr.mxu0 0.0
    %618 = vmatpush1.msra.mxu0 0.0
    %619 = vmatprep.subr.mxu0 0.0
    %620 = vmatpush1.msra.mxu0 0.0
    %621 = vmatprep.subr.mxu0 0.0
    %622 = vmatpush1.msra.mxu0 0.0
    %623 = vmatprep.subr.mxu0 0.0
    %624 = vmatpush1.msra.mxu0 0.0
    %625 = vmatprep.subr.mxu0 0.0
    %626 = vmatpush1.msra.mxu0 0.0
    %627 = vmatprep.subr.mxu0 0.0
    %628 = vmatpush1.msra.mxu0 0.0
    %629 = vmatprep.subr.mxu0 0.0
    %630 = vmatpush1.msra.mxu0 0.0
    %631 = vmatprep.subr.mxu0 0.0
    %632 = vmatpush1.msra.mxu0 0.0
    %633 = vmatprep.subr.mxu0 0.0
    %634 = vmatpush1.msra.mxu0 0.0
    %635 = vmatprep.subr.mxu0 0.0
    %636 = vmatpush1.msra.mxu0 0.0
    %637 = vmatprep.subr.mxu0 0.0
    %638 = vmatpush1.msra.mxu0 0.0
    %639 = vmatprep.subr.mxu0 0.0
    %640 = vmatpush1.msra.mxu0 0.0
    %641 = vmatprep.subr.mxu0 0.0
    %642 = vmatpush1.msra.mxu0 0.0
    %643 = vmatprep.subr.mxu0 0.0
    %644 = vmatpush1.msra.mxu0 0.0
    %645 = vmatprep.subr.mxu0 0.0
    %646 = vmatpush1.msra.mxu0 0.0
    %647 = vmatprep.subr.mxu0 0.0
    %648 = vmatpush1.msra.mxu0 0.0
    %649 = vmatprep.subr.mxu0 0.0
    %650 = vmatpush1.msra.mxu0 0.0
    %651 = vmatprep.subr.mxu0 0.0
    %652 = vmatpush1.msra.mxu0 0.0
    %653 = vmatprep.subr.mxu0 0.0
    %654 = vmatpush1.msra.mxu0 0.0
    %655 = vmatprep.subr.mxu0 0.0
    %656 = vmatpush1.msra.mxu0 0.0
    %657 = vmatprep.subr.mxu0 0.0
    %658 = vmatpush1.msra.mxu0 0.0
    %659 = vmatprep.subr.mxu0 0.0
    %660 = vmatpush1.msra.mxu0 0.0
    %661 = vmatprep.subr.mxu0 0.0
    %662 = vmatpush1.msra.mxu0 0.0
    %663 = vmatprep.subr.mxu0 0.0
    %664 = vmatpush1.msra.mxu0 0.0
    %665 = vmatprep.subr.mxu0 0.0
    %666 = vmatpush1.msra.mxu0 0.0
    %667 = vmatprep.subr.mxu0 0.0
    %668 = vmatpush1.msra.mxu0 0.0
    %669 = vmatprep.subr.mxu0 0.0
    %670 = vmatpush1.msra.mxu0 0.0
    %671 = vmatprep.mubr.f32.mxu0 0.0
    %672 = vmatmul.mubr.f32.gmra.mrb[0].mxu0 %v605
    %v673 = vpop.f32.mrb[0].mxu0
    %v674 = vadd.f32 0.0, %v673
    %v675 = vpop.f32.mrb[0].mxu0
    %676 = vdwg.mxu0
    %v677 = vadd.f32 %v603, %v674
    %s678 = sadd.s32 32, 8
    %s679 = scalar_lea.vmem [#allocation2], %s678
    %680 = vst.msk [vmem:[%s679] sm:$0xff] %vm259, %v677
    %s681 = scalar_lea.vmem [#allocation2], 40
    %v682 = vld [vmem:[%s681] sm:$0xff]
    %s683 = scalar_lea.vmem [#allocation3], 40
    %v684 = vld [vmem:[%s683] sm:$0xff]
    %v686 = vsel %vm259, %v682, 0
    %688 = vmatprep.subr.mxu0 0.0
    %689 = vmatpush1.msra.mxu0 %v48
    %690 = vmatprep.subr.mxu0 0.0
    %691 = vmatpush1.msra.mxu0 %v49
    %692 = vmatprep.subr.mxu0 0.0
    %693 = vmatpush1.msra.mxu0 %v50
    %694 = vmatprep.subr.mxu0 0.0
    %695 = vmatpush1.msra.mxu0 %v51
    %696 = vmatprep.subr.mxu0 0.0
    %697 = vmatpush1.msra.mxu0 0.0
    %698 = vmatprep.subr.mxu0 0.0
    %699 = vmatpush1.msra.mxu0 0.0
    %700 = vmatprep.subr.mxu0 0.0
    %701 = vmatpush1.msra.mxu0 0.0
    %702 = vmatprep.subr.mxu0 0.0
    %703 = vmatpush1.msra.mxu0 0.0
    %704 = vmatprep.subr.mxu0 0.0
    %705 = vmatpush1.msra.mxu0 0.0
    %706 = vmatprep.subr.mxu0 0.0
    %707 = vmatpush1.msra.mxu0 0.0
    %708 = vmatprep.subr.mxu0 0.0
    %709 = vmatpush1.msra.mxu0 0.0
    %710 = vmatprep.subr.mxu0 0.0
    %711 = vmatpush1.msra.mxu0 0.0
    %712 = vmatprep.subr.mxu0 0.0
    %713 = vmatpush1.msra.mxu0 0.0
    %714 = vmatprep.subr.mxu0 0.0
    %715 = vmatpush1.msra.mxu0 0.0
    %716 = vmatprep.subr.mxu0 0.0
    %717 = vmatpush1.msra.mxu0 0.0
    %718 = vmatprep.subr.mxu0 0.0
    %719 = vmatpush1.msra.mxu0 0.0
    %720 = vmatprep.subr.mxu0 0.0
    %721 = vmatpush1.msra.mxu0 0.0
    %722 = vmatprep.subr.mxu0 0.0
    %723 = vmatpush1.msra.mxu0 0.0
    %724 = vmatprep.subr.mxu0 0.0
    %725 = vmatpush1.msra.mxu0 0.0
    %726 = vmatprep.subr.mxu0 0.0
    %727 = vmatpush1.msra.mxu0 0.0
    %728 = vmatprep.subr.mxu0 0.0
    %729 = vmatpush1.msra.mxu0 0.0
    %730 = vmatprep.subr.mxu0 0.0
    %731 = vmatpush1.msra.mxu0 0.0
    %732 = vmatprep.subr.mxu0 0.0
    %733 = vmatpush1.msra.mxu0 0.0
    %734 = vmatprep.subr.mxu0 0.0
    %735 = vmatpush1.msra.mxu0 0.0
    %736 = vmatprep.subr.mxu0 0.0
    %737 = vmatpush1.msra.mxu0 0.0
    %738 = vmatprep.subr.mxu0 0.0
    %739 = vmatpush1.msra.mxu0 0.0
    %740 = vmatprep.subr.mxu0 0.0
    %741 = vmatpush1.msra.mxu0 0.0
    %742 = vmatprep.subr.mxu0 0.0
    %743 = vmatpush1.msra.mxu0 0.0
    %744 = vmatprep.subr.mxu0 0.0
    %745 = vmatpush1.msra.mxu0 0.0
    %746 = vmatprep.subr.mxu0 0.0
    %747 = vmatpush1.msra.mxu0 0.0
    %748 = vmatprep.subr.mxu0 0.0
    %749 = vmatpush1.msra.mxu0 0.0
    %750 = vmatprep.subr.mxu0 0.0
    %751 = vmatpush1.msra.mxu0 0.0
    %752 = vmatprep.mubr.f32.mxu0 0.0
    %753 = vmatmul.mubr.f32.gmra.mrb[0].mxu0 %v686
    %v754 = vpop.f32.mrb[0].mxu0
    %v755 = vadd.f32 0.0, %v754
    %v756 = vpop.f32.mrb[0].mxu0
    %757 = vdwg.mxu0
    %v758 = vadd.f32 %v684, %v755
    %s759 = sadd.s32 40, 8
    %s760 = scalar_lea.vmem [#allocation2], %s759
    %761 = vst.msk [vmem:[%s760] sm:$0xff] %vm259, %v758
    %s762 = scalar_lea.vmem [#allocation2], 48
    %v763 = vld [vmem:[%s762] sm:$0xff]
    %s764 = scalar_lea.vmem [#allocation3], 48
    %v765 = vld [vmem:[%s764] sm:$0xff]
    %v767 = vsel %vm259, %v763, 0
    %769 = vmatprep.subr.mxu0 0.0
    %770 = vmatpush1.msra.mxu0 %v48
    %771 = vmatprep.subr.mxu0 0.0
    %772 = vmatpush1.msra.mxu0 %v49
    %773 = vmatprep.subr.mxu0 0.0
    %774 = vmatpush1.msra.mxu0 %v50
    %775 = vmatprep.subr.mxu0 0.0
    %776 = vmatpush1.msra.mxu0 %v51
    %777 = vmatprep.subr.mxu0 0.0
    %778 = vmatpush1.msra.mxu0 0.0
    %779 = vmatprep.subr.mxu0 0.0
    %780 = vmatpush1.msra.mxu0 0.0
    %781 = vmatprep.subr.mxu0 0.0
    %782 = vmatpush1.msra.mxu0 0.0
    %783 = vmatprep.subr.mxu0 0.0
    %784 = vmatpush1.msra.mxu0 0.0
    %785 = vmatprep.subr.mxu0 0.0
    %786 = vmatpush1.msra.mxu0 0.0
    %787 = vmatprep.subr.mxu0 0.0
    %788 = vmatpush1.msra.mxu0 0.0
    %789 = vmatprep.subr.mxu0 0.0
    %790 = vmatpush1.msra.mxu0 0.0
    %791 = vmatprep.subr.mxu0 0.0
    %792 = vmatpush1.msra.mxu0 0.0
    %793 = vmatprep.subr.mxu0 0.0
    %794 = vmatpush1.msra.mxu0 0.0
    %795 = vmatprep.subr.mxu0 0.0
    %796 = vmatpush1.msra.mxu0 0.0
    %797 = vmatprep.subr.mxu0 0.0
    %798 = vmatpush1.msra.mxu0 0.0
    %799 = vmatprep.subr.mxu0 0.0
    %800 = vmatpush1.msra.mxu0 0.0
    %801 = vmatprep.subr.mxu0 0.0
    %802 = vmatpush1.msra.mxu0 0.0
    %803 = vmatprep.subr.mxu0 0.0
    %804 = vmatpush1.msra.mxu0 0.0
    %805 = vmatprep.subr.mxu0 0.0
    %806 = vmatpush1.msra.mxu0 0.0
    %807 = vmatprep.subr.mxu0 0.0
    %808 = vmatpush1.msra.mxu0 0.0
    %809 = vmatprep.subr.mxu0 0.0
    %810 = vmatpush1.msra.mxu0 0.0
    %811 = vmatprep.subr.mxu0 0.0
    %812 = vmatpush1.msra.mxu0 0.0
    %813 = vmatprep.subr.mxu0 0.0
    %814 = vmatpush1.msra.mxu0 0.0
    %815 = vmatprep.subr.mxu0 0.0
    %816 = vmatpush1.msra.mxu0 0.0
    %817 = vmatprep.subr.mxu0 0.0
    %818 = vmatpush1.msra.mxu0 0.0
    %819 = vmatprep.subr.mxu0 0.0
    %820 = vmatpush1.msra.mxu0 0.0
    %821 = vmatprep.subr.mxu0 0.0
    %822 = vmatpush1.msra.mxu0 0.0
    %823 = vmatprep.subr.mxu0 0.0
    %824 = vmatpush1.msra.mxu0 0.0
    %825 = vmatprep.subr.mxu0 0.0
    %826 = vmatpush1.msra.mxu0 0.0
    %827 = vmatprep.subr.mxu0 0.0
    %828 = vmatpush1.msra.mxu0 0.0
    %829 = vmatprep.subr.mxu0 0.0
    %830 = vmatpush1.msra.mxu0 0.0
    %831 = vmatprep.subr.mxu0 0.0
    %832 = vmatpush1.msra.mxu0 0.0
    %833 = vmatprep.mubr.f32.mxu0 0.0
    %834 = vmatmul.mubr.f32.gmra.mrb[0].mxu0 %v767
    %v835 = vpop.f32.mrb[0].mxu0
    %v836 = vadd.f32 0.0, %v835
    %v837 = vpop.f32.mrb[0].mxu0
    %838 = vdwg.mxu0
    %v839 = vadd.f32 %v765, %v836
    %s840 = sadd.s32 48, 8
    %s841 = scalar_lea.vmem [#allocation2], %s840
    %842 = vst.msk [vmem:[%s841] sm:$0xff] %vm259, %v839
    %s843 = scalar_lea.vmem [#allocation2], 56
    %v844 = vld [vmem:[%s843] sm:$0xff]
    %s845 = scalar_lea.vmem [#allocation3], 56
    %v846 = vld [vmem:[%s845] sm:$0xff]
    %v848 = vsel %vm259, %v844, 0
    %850 = vmatprep.subr.mxu0 0.0
    %851 = vmatpush1.msra.mxu0 %v48
    %852 = vmatprep.subr.mxu0 0.0
    %853 = vmatpush1.msra.mxu0 %v49
    %854 = vmatprep.subr.mxu0 0.0
    %855 = vmatpush1.msra.mxu0 %v50
    %856 = vmatprep.subr.mxu0 0.0
    %857 = vmatpush1.msra.mxu0 %v51
    %858 = vmatprep.subr.mxu0 0.0
    %859 = vmatpush1.msra.mxu0 0.0
    %860 = vmatprep.subr.mxu0 0.0
    %861 = vmatpush1.msra.mxu0 0.0
    %862 = vmatprep.subr.mxu0 0.0
    %863 = vmatpush1.msra.mxu0 0.0
    %864 = vmatprep.subr.mxu0 0.0
    %865 = vmatpush1.msra.mxu0 0.0
    %866 = vmatprep.subr.mxu0 0.0
    %867 = vmatpush1.msra.mxu0 0.0
    %868 = vmatprep.subr.mxu0 0.0
    %869 = vmatpush1.msra.mxu0 0.0
    %870 = vmatprep.subr.mxu0 0.0
    %871 = vmatpush1.msra.mxu0 0.0
    %872 = vmatprep.subr.mxu0 0.0
    %873 = vmatpush1.msra.mxu0 0.0
    %874 = vmatprep.subr.mxu0 0.0
    %875 = vmatpush1.msra.mxu0 0.0
    %876 = vmatprep.subr.mxu0 0.0
    %877 = vmatpush1.msra.mxu0 0.0
    %878 = vmatprep.subr.mxu0 0.0
    %879 = vmatpush1.msra.mxu0 0.0
    %880 = vmatprep.subr.mxu0 0.0
    %881 = vmatpush1.msra.mxu0 0.0
    %882 = vmatprep.subr.mxu0 0.0
    %883 = vmatpush1.msra.mxu0 0.0
    %884 = vmatprep.subr.mxu0 0.0
    %885 = vmatpush1.msra.mxu0 0.0
    %886 = vmatprep.subr.mxu0 0.0
    %887 = vmatpush1.msra.mxu0 0.0
    %888 = vmatprep.subr.mxu0 0.0
    %889 = vmatpush1.msra.mxu0 0.0
    %890 = vmatprep.subr.mxu0 0.0
    %891 = vmatpush1.msra.mxu0 0.0
    %892 = vmatprep.subr.mxu0 0.0
    %893 = vmatpush1.msra.mxu0 0.0
    %894 = vmatprep.subr.mxu0 0.0
    %895 = vmatpush1.msra.mxu0 0.0
    %896 = vmatprep.subr.mxu0 0.0
    %897 = vmatpush1.msra.mxu0 0.0
    %898 = vmatprep.subr.mxu0 0.0
    %899 = vmatpush1.msra.mxu0 0.0
    %900 = vmatprep.subr.mxu0 0.0
    %901 = vmatpush1.msra.mxu0 0.0
    %902 = vmatprep.subr.mxu0 0.0
    %903 = vmatpush1.msra.mxu0 0.0
    %904 = vmatprep.subr.mxu0 0.0
    %905 = vmatpush1.msra.mxu0 0.0
    %906 = vmatprep.subr.mxu0 0.0
    %907 = vmatpush1.msra.mxu0 0.0
    %908 = vmatprep.subr.mxu0 0.0
    %909 = vmatpush1.msra.mxu0 0.0
    %910 = vmatprep.subr.mxu0 0.0
    %911 = vmatpush1.msra.mxu0 0.0
    %912 = vmatprep.subr.mxu0 0.0
    %913 = vmatpush1.msra.mxu0 0.0
    %914 = vmatprep.mubr.f32.mxu0 0.0
    %915 = vmatmul.mubr.f32.gmra.mrb[0].mxu0 %v848
    %v916 = vpop.f32.mrb[0].mxu0
    %v917 = vadd.f32 0.0, %v916
    %v918 = vpop.f32.mrb[0].mxu0
    %919 = vdwg.mxu0
    %v920 = vadd.f32 %v846, %v917
    %s921 = sadd.s32 56, 8
    %s922 = scalar_lea.vmem [#allocation2], %s921
    %923 = vst.msk [vmem:[%s922] sm:$0xff] %vm259, %v920
    %s924 = scalar_lea.vmem [#allocation2], 64
    %v925 = vld [vmem:[%s924] sm:$0xff]
    %s926 = scalar_lea.vmem [#allocation3], 64
    %v927 = vld [vmem:[%s926] sm:$0xff]
    %v929 = vsel %vm259, %v925, 0
    %931 = vmatprep.subr.mxu0 0.0
    %932 = vmatpush1.msra.mxu0 %v48
    %933 = vmatprep.subr.mxu0 0.0
    %934 = vmatpush1.msra.mxu0 %v49
    %935 = vmatprep.subr.mxu0 0.0
    %936 = vmatpush1.msra.mxu0 %v50
    %937 = vmatprep.subr.mxu0 0.0
    %938 = vmatpush1.msra.mxu0 %v51
    %939 = vmatprep.subr.mxu0 0.0
    %940 = vmatpush1.msra.mxu0 0.0
    %941 = vmatprep.subr.mxu0 0.0
    %942 = vmatpush1.msra.mxu0 0.0
    %943 = vmatprep.subr.mxu0 0.0
    %944 = vmatpush1.msra.mxu0 0.0
    %945 = vmatprep.subr.mxu0 0.0
    %946 = vmatpush1.msra.mxu0 0.0
    %947 = vmatprep.subr.mxu0 0.0
    %948 = vmatpush1.msra.mxu0 0.0
    %949 = vmatprep.subr.mxu0 0.0
    %950 = vmatpush1.msra.mxu0 0.0
    %951 = vmatprep.subr.mxu0 0.0
    %952 = vmatpush1.msra.mxu0 0.0
    %953 = vmatprep.subr.mxu0 0.0
    %954 = vmatpush1.msra.mxu0 0.0
    %955 = vmatprep.subr.mxu0 0.0
    %956 = vmatpush1.msra.mxu0 0.0
    %957 = vmatprep.subr.mxu0 0.0
    %958 = vmatpush1.msra.mxu0 0.0
    %959 = vmatprep.subr.mxu0 0.0
    %960 = vmatpush1.msra.mxu0 0.0
    %961 = vmatprep.subr.mxu0 0.0
    %962 = vmatpush1.msra.mxu0 0.0
    %963 = vmatprep.subr.mxu0 0.0
    %964 = vmatpush1.msra.mxu0 0.0
    %965 = vmatprep.subr.mxu0 0.0
    %966 = vmatpush1.msra.mxu0 0.0
    %967 = vmatprep.subr.mxu0 0.0
    %968 = vmatpush1.msra.mxu0 0.0
    %969 = vmatprep.subr.mxu0 0.0
    %970 = vmatpush1.msra.mxu0 0.0
    %971 = vmatprep.subr.mxu0 0.0
    %972 = vmatpush1.msra.mxu0 0.0
    %973 = vmatprep.subr.mxu0 0.0
    %974 = vmatpush1.msra.mxu0 0.0
    %975 = vmatprep.subr.mxu0 0.0
    %976 = vmatpush1.msra.mxu0 0.0
    %977 = vmatprep.subr.mxu0 0.0
    %978 = vmatpush1.msra.mxu0 0.0
    %979 = vmatprep.subr.mxu0 0.0
    %980 = vmatpush1.msra.mxu0 0.0
    %981 = vmatprep.subr.mxu0 0.0
    %982 = vmatpush1.msra.mxu0 0.0
    %983 = vmatprep.subr.mxu0 0.0
    %984 = vmatpush1.msra.mxu0 0.0
    %985 = vmatprep.subr.mxu0 0.0
    %986 = vmatpush1.msra.mxu0 0.0
    %987 = vmatprep.subr.mxu0 0.0
    %988 = vmatpush1.msra.mxu0 0.0
    %989 = vmatprep.subr.mxu0 0.0
    %990 = vmatpush1.msra.mxu0 0.0
    %991 = vmatprep.subr.mxu0 0.0
    %992 = vmatpush1.msra.mxu0 0.0
    %993 = vmatprep.subr.mxu0 0.0
    %994 = vmatpush1.msra.mxu0 0.0
    %995 = vmatprep.mubr.f32.mxu0 0.0
    %996 = vmatmul.mubr.f32.gmra.mrb[0].mxu0 %v929
    %v997 = vpop.f32.mrb[0].mxu0
    %v998 = vadd.f32 0.0, %v997
    %v999 = vpop.f32.mrb[0].mxu0
    %1000 = vdwg.mxu0
    %v1001 = vadd.f32 %v927, %v998
    %s1002 = sadd.s32 64, 8
    %s1003 = scalar_lea.vmem [#allocation2], %s1002
    %1004 = vst.msk [vmem:[%s1003] sm:$0xff] %vm259, %v1001
    %s1005 = scalar_lea.vmem [#allocation2], 72
    %v1006 = vld [vmem:[%s1005] sm:$0xff]
    %s1007 = scalar_lea.vmem [#allocation3], 72
    %v1008 = vld [vmem:[%s1007] sm:$0xff]
    %v1010 = vsel %vm259, %v1006, 0
    %1012 = vmatprep.subr.mxu0 0.0
    %1013 = vmatpush1.msra.mxu0 %v48
    %1014 = vmatprep.subr.mxu0 0.0
    %1015 = vmatpush1.msra.mxu0 %v49
    %1016 = vmatprep.subr.mxu0 0.0
    %1017 = vmatpush1.msra.mxu0 %v50
    %1018 = vmatprep.subr.mxu0 0.0
    %1019 = vmatpush1.msra.mxu0 %v51
    %1020 = vmatprep.subr.mxu0 0.0
    %1021 = vmatpush1.msra.mxu0 0.0
    %1022 = vmatprep.subr.mxu0 0.0
    %1023 = vmatpush1.msra.mxu0 0.0
    %1024 = vmatprep.subr.mxu0 0.0
    %1025 = vmatpush1.msra.mxu0 0.0
    %1026 = vmatprep.subr.mxu0 0.0
    %1027 = vmatpush1.msra.mxu0 0.0
    %1028 = vmatprep.subr.mxu0 0.0
    %1029 = vmatpush1.msra.mxu0 0.0
    %1030 = vmatprep.subr.mxu0 0.0
    %1031 = vmatpush1.msra.mxu0 0.0
    %1032 = vmatprep.subr.mxu0 0.0
    %1033 = vmatpush1.msra.mxu0 0.0
    %1034 = vmatprep.subr.mxu0 0.0
    %1035 = vmatpush1.msra.mxu0 0.0
    %1036 = vmatprep.subr.mxu0 0.0
    %1037 = vmatpush1.msra.mxu0 0.0
    %1038 = vmatprep.subr.mxu0 0.0
    %1039 = vmatpush1.msra.mxu0 0.0
    %1040 = vmatprep.subr.mxu0 0.0
    %1041 = vmatpush1.msra.mxu0 0.0
    %1042 = vmatprep.subr.mxu0 0.0
    %1043 = vmatpush1.msra.mxu0 0.0
    %1044 = vmatprep.subr.mxu0 0.0
    %1045 = vmatpush1.msra.mxu0 0.0
    %1046 = vmatprep.subr.mxu0 0.0
    %1047 = vmatpush1.msra.mxu0 0.0
    %1048 = vmatprep.subr.mxu0 0.0
    %1049 = vmatpush1.msra.mxu0 0.0
    %1050 = vmatprep.subr.mxu0 0.0
    %1051 = vmatpush1.msra.mxu0 0.0
    %1052 = vmatprep.subr.mxu0 0.0
    %1053 = vmatpush1.msra.mxu0 0.0
    %1054 = vmatprep.subr.mxu0 0.0
    %1055 = vmatpush1.msra.mxu0 0.0
    %1056 = vmatprep.subr.mxu0 0.0
    %1057 = vmatpush1.msra.mxu0 0.0
    %1058 = vmatprep.subr.mxu0 0.0
    %1059 = vmatpush1.msra.mxu0 0.0
    %1060 = vmatprep.subr.mxu0 0.0
    %1061 = vmatpush1.msra.mxu0 0.0
    %1062 = vmatprep.subr.mxu0 0.0
    %1063 = vmatpush1.msra.mxu0 0.0
    %1064 = vmatprep.subr.mxu0 0.0
    %1065 = vmatpush1.msra.mxu0 0.0
    %1066 = vmatprep.subr.mxu0 0.0
    %1067 = vmatpush1.msra.mxu0 0.0
    %1068 = vmatprep.subr.mxu0 0.0
    %1069 = vmatpush1.msra.mxu0 0.0
    %1070 = vmatprep.subr.mxu0 0.0
    %1071 = vmatpush1.msra.mxu0 0.0
    %1072 = vmatprep.subr.mxu0 0.0
    %1073 = vmatpush1.msra.mxu0 0.0
    %1074 = vmatprep.subr.mxu0 0.0
    %1075 = vmatpush1.msra.mxu0 0.0
    %1076 = vmatprep.mubr.f32.mxu0 0.0
    %1077 = vmatmul.mubr.f32.gmra.mrb[0].mxu0 %v1010
    %v1078 = vpop.f32.mrb[0].mxu0
    %v1079 = vadd.f32 0.0, %v1078
    %v1080 = vpop.f32.mrb[0].mxu0
    %1081 = vdwg.mxu0
    %v1082 = vadd.f32 %v1008, %v1079
    %s1083 = sadd.s32 72, 8
    %s1084 = scalar_lea.vmem [#allocation2], %s1083
    %1085 = vst.msk [vmem:[%s1084] sm:$0xff] %vm259, %v1082
    %s1086 = scalar_lea.vmem [#allocation2], 80
    %v1087 = vld [vmem:[%s1086] sm:$0xff]
    %s1088 = scalar_lea.vmem [#allocation3], 80
    %v1089 = vld [vmem:[%s1088] sm:$0xff]
    %v1091 = vsel %vm259, %v1087, 0
    %1093 = vmatprep.subr.mxu0 0.0
    %1094 = vmatpush1.msra.mxu0 %v48
    %1095 = vmatprep.subr.mxu0 0.0
    %1096 = vmatpush1.msra.mxu0 %v49
    %1097 = vmatprep.subr.mxu0 0.0
    %1098 = vmatpush1.msra.mxu0 %v50
    %1099 = vmatprep.subr.mxu0 0.0
    %1100 = vmatpush1.msra.mxu0 %v51
    %1101 = vmatprep.subr.mxu0 0.0
    %1102 = vmatpush1.msra.mxu0 0.0
    %1103 = vmatprep.subr.mxu0 0.0
    %1104 = vmatpush1.msra.mxu0 0.0
    %1105 = vmatprep.subr.mxu0 0.0
    %1106 = vmatpush1.msra.mxu0 0.0
    %1107 = vmatprep.subr.mxu0 0.0
    %1108 = vmatpush1.msra.mxu0 0.0
    %1109 = vmatprep.subr.mxu0 0.0
    %1110 = vmatpush1.msra.mxu0 0.0
    %1111 = vmatprep.subr.mxu0 0.0
    %1112 = vmatpush1.msra.mxu0 0.0
    %1113 = vmatprep.subr.mxu0 0.0
    %1114 = vmatpush1.msra.mxu0 0.0
    %1115 = vmatprep.subr.mxu0 0.0
    %1116 = vmatpush1.msra.mxu0 0.0
    %1117 = vmatprep.subr.mxu0 0.0
    %1118 = vmatpush1.msra.mxu0 0.0
    %1119 = vmatprep.subr.mxu0 0.0
    %1120 = vmatpush1.msra.mxu0 0.0
    %1121 = vmatprep.subr.mxu0 0.0
    %1122 = vmatpush1.msra.mxu0 0.0
    %1123 = vmatprep.subr.mxu0 0.0
    %1124 = vmatpush1.msra.mxu0 0.0
    %1125 = vmatprep.subr.mxu0 0.0
    %1126 = vmatpush1.msra.mxu0 0.0
    %1127 = vmatprep.subr.mxu0 0.0
    %1128 = vmatpush1.msra.mxu0 0.0
    %1129 = vmatprep.subr.mxu0 0.0
    %1130 = vmatpush1.msra.mxu0 0.0
    %1131 = vmatprep.subr.mxu0 0.0
    %1132 = vmatpush1.msra.mxu0 0.0
    %1133 = vmatprep.subr.mxu0 0.0
    %1134 = vmatpush1.msra.mxu0 0.0
    %1135 = vmatprep.subr.mxu0 0.0
    %1136 = vmatpush1.msra.mxu0 0.0
    %1137 = vmatprep.subr.mxu0 0.0
    %1138 = vmatpush1.msra.mxu0 0.0
    %1139 = vmatprep.subr.mxu0 0.0
    %1140 = vmatpush1.msra.mxu0 0.0
    %1141 = vmatprep.subr.mxu0 0.0
    %1142 = vmatpush1.msra.mxu0 0.0
    %1143 = vmatprep.subr.mxu0 0.0
    %1144 = vmatpush1.msra.mxu0 0.0
    %1145 = vmatprep.subr.mxu0 0.0
    %1146 = vmatpush1.msra.mxu0 0.0
    %1147 = vmatprep.subr.mxu0 0.0
    %1148 = vmatpush1.msra.mxu0 0.0
    %1149 = vmatprep.subr.mxu0 0.0
    %1150 = vmatpush1.msra.mxu0 0.0
    %1151 = vmatprep.subr.mxu0 0.0
    %1152 = vmatpush1.msra.mxu0 0.0
    %1153 = vmatprep.subr.mxu0 0.0
    %1154 = vmatpush1.msra.mxu0 0.0
    %1155 = vmatprep.subr.mxu0 0.0
    %1156 = vmatpush1.msra.mxu0 0.0
    %1157 = vmatprep.mubr.f32.mxu0 0.0
    %1158 = vmatmul.mubr.f32.gmra.mrb[0].mxu0 %v1091
    %v1159 = vpop.f32.mrb[0].mxu0
    %v1160 = vadd.f32 0.0, %v1159
    %v1161 = vpop.f32.mrb[0].mxu0
    %1162 = vdwg.mxu0
    %v1163 = vadd.f32 %v1089, %v1160
    %s1164 = sadd.s32 80, 8
    %s1165 = scalar_lea.vmem [#allocation2], %s1164
    %1166 = vst.msk [vmem:[%s1165] sm:$0xff] %vm259, %v1163
    %s1167 = scalar_lea.vmem [#allocation2], 88
    %v1168 = vld [vmem:[%s1167] sm:$0xff]
    %s1169 = scalar_lea.vmem [#allocation3], 88
    %v1170 = vld [vmem:[%s1169] sm:$0xff]
    %v1172 = vsel %vm259, %v1168, 0
    %1174 = vmatprep.subr.mxu0 0.0
    %1175 = vmatpush1.msra.mxu0 %v48
    %1176 = vmatprep.subr.mxu0 0.0
    %1177 = vmatpush1.msra.mxu0 %v49
    %1178 = vmatprep.subr.mxu0 0.0
    %1179 = vmatpush1.msra.mxu0 %v50
    %1180 = vmatprep.subr.mxu0 0.0
    %1181 = vmatpush1.msra.mxu0 %v51
    %1182 = vmatprep.subr.mxu0 0.0
    %1183 = vmatpush1.msra.mxu0 0.0
    %1184 = vmatprep.subr.mxu0 0.0
    %1185 = vmatpush1.msra.mxu0 0.0
    %1186 = vmatprep.subr.mxu0 0.0
    %1187 = vmatpush1.msra.mxu0 0.0
    %1188 = vmatprep.subr.mxu0 0.0
    %1189 = vmatpush1.msra.mxu0 0.0
    %1190 = vmatprep.subr.mxu0 0.0
    %1191 = vmatpush1.msra.mxu0 0.0
    %1192 = vmatprep.subr.mxu0 0.0
    %1193 = vmatpush1.msra.mxu0 0.0
    %1194 = vmatprep.subr.mxu0 0.0
    %1195 = vmatpush1.msra.mxu0 0.0
    %1196 = vmatprep.subr.mxu0 0.0
    %1197 = vmatpush1.msra.mxu0 0.0
    %1198 = vmatprep.subr.mxu0 0.0
    %1199 = vmatpush1.msra.mxu0 0.0
    %1200 = vmatprep.subr.mxu0 0.0
    %1201 = vmatpush1.msra.mxu0 0.0
    %1202 = vmatprep.subr.mxu0 0.0
    %1203 = vmatpush1.msra.mxu0 0.0
    %1204 = vmatprep.subr.mxu0 0.0
    %1205 = vmatpush1.msra.mxu0 0.0
    %1206 = vmatprep.subr.mxu0 0.0
    %1207 = vmatpush1.msra.mxu0 0.0
    %1208 = vmatprep.subr.mxu0 0.0
    %1209 = vmatpush1.msra.mxu0 0.0
    %1210 = vmatprep.subr.mxu0 0.0
    %1211 = vmatpush1.msra.mxu0 0.0
    %1212 = vmatprep.subr.mxu0 0.0
    %1213 = vmatpush1.msra.mxu0 0.0
    %1214 = vmatprep.subr.mxu0 0.0
    %1215 = vmatpush1.msra.mxu0 0.0
    %1216 = vmatprep.subr.mxu0 0.0
    %1217 = vmatpush1.msra.mxu0 0.0
    %1218 = vmatprep.subr.mxu0 0.0
    %1219 = vmatpush1.msra.mxu0 0.0
    %1220 = vmatprep.subr.mxu0 0.0
    %1221 = vmatpush1.msra.mxu0 0.0
    %1222 = vmatprep.subr.mxu0 0.0
    %1223 = vmatpush1.msra.mxu0 0.0
    %1224 = vmatprep.subr.mxu0 0.0
    %1225 = vmatpush1.msra.mxu0 0.0
    %1226 = vmatprep.subr.mxu0 0.0
    %1227 = vmatpush1.msra.mxu0 0.0
    %1228 = vmatprep.subr.mxu0 0.0
    %1229 = vmatpush1.msra.mxu0 0.0
    %1230 = vmatprep.subr.mxu0 0.0
    %1231 = vmatpush1.msra.mxu0 0.0
    %1232 = vmatprep.subr.mxu0 0.0
    %1233 = vmatpush1.msra.mxu0 0.0
    %1234 = vmatprep.subr.mxu0 0.0
    %1235 = vmatpush1.msra.mxu0 0.0
    %1236 = vmatprep.subr.mxu0 0.0
    %1237 = vmatpush1.msra.mxu0 0.0
    %1238 = vmatprep.mubr.f32.mxu0 0.0
    %1239 = vmatmul.mubr.f32.gmra.mrb[0].mxu0 %v1172
    %v1240 = vpop.f32.mrb[0].mxu0
    %v1241 = vadd.f32 0.0, %v1240
    %v1242 = vpop.f32.mrb[0].mxu0
    %1243 = vdwg.mxu0
    %v1244 = vadd.f32 %v1170, %v1241
    %s1245 = sadd.s32 88, 8
    %s1246 = scalar_lea.vmem [#allocation2], %s1245
    %1247 = vst.msk [vmem:[%s1246] sm:$0xff] %vm259, %v1244
    %s1248 = scalar_lea.vmem [#allocation2], 96
    %v1249 = vld [vmem:[%s1248] sm:$0xff]
    %s1250 = scalar_lea.vmem [#allocation3], 96
    %v1251 = vld [vmem:[%s1250] sm:$0xff]
    %v1253 = vsel %vm259, %v1249, 0
    %1255 = vmatprep.subr.mxu0 0.0
    %1256 = vmatpush1.msra.mxu0 %v48
    %1257 = vmatprep.subr.mxu0 0.0
    %1258 = vmatpush1.msra.mxu0 %v49
    %1259 = vmatprep.subr.mxu0 0.0
    %1260 = vmatpush1.msra.mxu0 %v50
    %1261 = vmatprep.subr.mxu0 0.0
    %1262 = vmatpush1.msra.mxu0 %v51
    %1263 = vmatprep.subr.mxu0 0.0
    %1264 = vmatpush1.msra.mxu0 0.0
    %1265 = vmatprep.subr.mxu0 0.0
    %1266 = vmatpush1.msra.mxu0 0.0
    %1267 = vmatprep.subr.mxu0 0.0
    %1268 = vmatpush1.msra.mxu0 0.0
    %1269 = vmatprep.subr.mxu0 0.0
    %1270 = vmatpush1.msra.mxu0 0.0
    %1271 = vmatprep.subr.mxu0 0.0
    %1272 = vmatpush1.msra.mxu0 0.0
    %1273 = vmatprep.subr.mxu0 0.0
    %1274 = vmatpush1.msra.mxu0 0.0
    %1275 = vmatprep.subr.mxu0 0.0
    %1276 = vmatpush1.msra.mxu0 0.0
    %1277 = vmatprep.subr.mxu0 0.0
    %1278 = vmatpush1.msra.mxu0 0.0
    %1279 = vmatprep.subr.mxu0 0.0
    %1280 = vmatpush1.msra.mxu0 0.0
    %1281 = vmatprep.subr.mxu0 0.0
    %1282 = vmatpush1.msra.mxu0 0.0
    %1283 = vmatprep.subr.mxu0 0.0
    %1284 = vmatpush1.msra.mxu0 0.0
    %1285 = vmatprep.subr.mxu0 0.0
    %1286 = vmatpush1.msra.mxu0 0.0
    %1287 = vmatprep.subr.mxu0 0.0
    %1288 = vmatpush1.msra.mxu0 0.0
    %1289 = vmatprep.subr.mxu0 0.0
    %1290 = vmatpush1.msra.mxu0 0.0
    %1291 = vmatprep.subr.mxu0 0.0
    %1292 = vmatpush1.msra.mxu0 0.0
    %1293 = vmatprep.subr.mxu0 0.0
    %1294 = vmatpush1.msra.mxu0 0.0
    %1295 = vmatprep.subr.mxu0 0.0
    %1296 = vmatpush1.msra.mxu0 0.0
    %1297 = vmatprep.subr.mxu0 0.0
    %1298 = vmatpush1.msra.mxu0 0.0
    %1299 = vmatprep.subr.mxu0 0.0
    %1300 = vmatpush1.msra.mxu0 0.0
    %1301 = vmatprep.subr.mxu0 0.0
    %1302 = vmatpush1.msra.mxu0 0.0
    %1303 = vmatprep.subr.mxu0 0.0
    %1304 = vmatpush1.msra.mxu0 0.0
    %1305 = vmatprep.subr.mxu0 0.0
    %1306 = vmatpush1.msra.mxu0 0.0
    %1307 = vmatprep.subr.mxu0 0.0
    %1308 = vmatpush1.msra.mxu0 0.0
    %1309 = vmatprep.subr.mxu0 0.0
    %1310 = vmatpush1.msra.mxu0 0.0
    %1311 = vmatprep.subr.mxu0 0.0
    %1312 = vmatpush1.msra.mxu0 0.0
    %1313 = vmatprep.subr.mxu0 0.0
    %1314 = vmatpush1.msra.mxu0 0.0
    %1315 = vmatprep.subr.mxu0 0.0
    %1316 = vmatpush1.msra.mxu0 0.0
    %1317 = vmatprep.subr.mxu0 0.0
    %1318 = vmatpush1.msra.mxu0 0.0
    %1319 = vmatprep.mubr.f32.mxu0 0.0
    %1320 = vmatmul.mubr.f32.gmra.mrb[0].mxu0 %v1253
    %v1321 = vpop.f32.mrb[0].mxu0
    %v1322 = vadd.f32 0.0, %v1321
    %v1323 = vpop.f32.mrb[0].mxu0
    %1324 = vdwg.mxu0
    %v1325 = vadd.f32 %v1251, %v1322
    %s1326 = sadd.s32 96, 8
    %s1327 = scalar_lea.vmem [#allocation2], %s1326
    %1328 = vst.msk [vmem:[%s1327] sm:$0xff] %vm259, %v1325
    %s1329 = scalar_lea.vmem [#allocation2], 104
    %v1330 = vld [vmem:[%s1329] sm:$0xff]
    %s1331 = scalar_lea.vmem [#allocation3], 104
    %v1332 = vld [vmem:[%s1331] sm:$0xff]
    %v1334 = vsel %vm259, %v1330, 0
    %1336 = vmatprep.subr.mxu0 0.0
    %1337 = vmatpush1.msra.mxu0 %v48
    %1338 = vmatprep.subr.mxu0 0.0
    %1339 = vmatpush1.msra.mxu0 %v49
    %1340 = vmatprep.subr.mxu0 0.0
    %1341 = vmatpush1.msra.mxu0 %v50
    %1342 = vmatprep.subr.mxu0 0.0
    %1343 = vmatpush1.msra.mxu0 %v51
    %1344 = vmatprep.subr.mxu0 0.0
    %1345 = vmatpush1.msra.mxu0 0.0
    %1346 = vmatprep.subr.mxu0 0.0
    %1347 = vmatpush1.msra.mxu0 0.0
    %1348 = vmatprep.subr.mxu0 0.0
    %1349 = vmatpush1.msra.mxu0 0.0
    %1350 = vmatprep.subr.mxu0 0.0
    %1351 = vmatpush1.msra.mxu0 0.0
    %1352 = vmatprep.subr.mxu0 0.0
    %1353 = vmatpush1.msra.mxu0 0.0
    %1354 = vmatprep.subr.mxu0 0.0
    %1355 = vmatpush1.msra.mxu0 0.0
    %1356 = vmatprep.subr.mxu0 0.0
    %1357 = vmatpush1.msra.mxu0 0.0
    %1358 = vmatprep.subr.mxu0 0.0
    %1359 = vmatpush1.msra.mxu0 0.0
    %1360 = vmatprep.subr.mxu0 0.0
    %1361 = vmatpush1.msra.mxu0 0.0
    %1362 = vmatprep.subr.mxu0 0.0
    %1363 = vmatpush1.msra.mxu0 0.0
    %1364 = vmatprep.subr.mxu0 0.0
    %1365 = vmatpush1.msra.mxu0 0.0
    %1366 = vmatprep.subr.mxu0 0.0
    %1367 = vmatpush1.msra.mxu0 0.0
    %1368 = vmatprep.subr.mxu0 0.0
    %1369 = vmatpush1.msra.mxu0 0.0
    %1370 = vmatprep.subr.mxu0 0.0
    %1371 = vmatpush1.msra.mxu0 0.0
    %1372 = vmatprep.subr.mxu0 0.0
    %1373 = vmatpush1.msra.mxu0 0.0
    %1374 = vmatprep.subr.mxu0 0.0
    %1375 = vmatpush1.msra.mxu0 0.0
    %1376 = vmatprep.subr.mxu0 0.0
    %1377 = vmatpush1.msra.mxu0 0.0
    %1378 = vmatprep.subr.mxu0 0.0
    %1379 = vmatpush1.msra.mxu0 0.0
    %1380 = vmatprep.subr.mxu0 0.0
    %1381 = vmatpush1.msra.mxu0 0.0
    %1382 = vmatprep.subr.mxu0 0.0
    %1383 = vmatpush1.msra.mxu0 0.0
    %1384 = vmatprep.subr.mxu0 0.0
    %1385 = vmatpush1.msra.mxu0 0.0
    %1386 = vmatprep.subr.mxu0 0.0
    %1387 = vmatpush1.msra.mxu0 0.0
    %1388 = vmatprep.subr.mxu0 0.0
    %1389 = vmatpush1.msra.mxu0 0.0
    %1390 = vmatprep.subr.mxu0 0.0
    %1391 = vmatpush1.msra.mxu0 0.0
    %1392 = vmatprep.subr.mxu0 0.0
    %1393 = vmatpush1.msra.mxu0 0.0
    %1394 = vmatprep.subr.mxu0 0.0
    %1395 = vmatpush1.msra.mxu0 0.0
    %1396 = vmatprep.subr.mxu0 0.0
    %1397 = vmatpush1.msra.mxu0 0.0
    %1398 = vmatprep.subr.mxu0 0.0
    %1399 = vmatpush1.msra.mxu0 0.0
    %1400 = vmatprep.mubr.f32.mxu0 0.0
    %1401 = vmatmul.mubr.f32.gmra.mrb[0].mxu0 %v1334
    %v1402 = vpop.f32.mrb[0].mxu0
    %v1403 = vadd.f32 0.0, %v1402
    %v1404 = vpop.f32.mrb[0].mxu0
    %1405 = vdwg.mxu0
    %v1406 = vadd.f32 %v1332, %v1403
    %s1407 = sadd.s32 104, 8
    %s1408 = scalar_lea.vmem [#allocation2], %s1407
    %1409 = vst.msk [vmem:[%s1408] sm:$0xff] %vm259, %v1406
    %s1410 = scalar_lea.vmem [#allocation2], 112
    %v1411 = vld [vmem:[%s1410] sm:$0xff]
    %s1412 = scalar_lea.vmem [#allocation3], 112
    %v1413 = vld [vmem:[%s1412] sm:$0xff]
    %v1415 = vsel %vm259, %v1411, 0
    %1417 = vmatprep.subr.mxu0 0.0
    %1418 = vmatpush1.msra.mxu0 %v48
    %1419 = vmatprep.subr.mxu0 0.0
    %1420 = vmatpush1.msra.mxu0 %v49
    %1421 = vmatprep.subr.mxu0 0.0
    %1422 = vmatpush1.msra.mxu0 %v50
    %1423 = vmatprep.subr.mxu0 0.0
    %1424 = vmatpush1.msra.mxu0 %v51
    %1425 = vmatprep.subr.mxu0 0.0
    %1426 = vmatpush1.msra.mxu0 0.0
    %1427 = vmatprep.subr.mxu0 0.0
    %1428 = vmatpush1.msra.mxu0 0.0
    %1429 = vmatprep.subr.mxu0 0.0
    %1430 = vmatpush1.msra.mxu0 0.0
    %1431 = vmatprep.subr.mxu0 0.0
    %1432 = vmatpush1.msra.mxu0 0.0
    %1433 = vmatprep.subr.mxu0 0.0
    %1434 = vmatpush1.msra.mxu0 0.0
    %1435 = vmatprep.subr.mxu0 0.0
    %1436 = vmatpush1.msra.mxu0 0.0
    %1437 = vmatprep.subr.mxu0 0.0
    %1438 = vmatpush1.msra.mxu0 0.0
    %1439 = vmatprep.subr.mxu0 0.0
    %1440 = vmatpush1.msra.mxu0 0.0
    %1441 = vmatprep.subr.mxu0 0.0
    %1442 = vmatpush1.msra.mxu0 0.0
    %1443 = vmatprep.subr.mxu0 0.0
    %1444 = vmatpush1.msra.mxu0 0.0
    %1445 = vmatprep.subr.mxu0 0.0
    %1446 = vmatpush1.msra.mxu0 0.0
    %1447 = vmatprep.subr.mxu0 0.0
    %1448 = vmatpush1.msra.mxu0 0.0
    %1449 = vmatprep.subr.mxu0 0.0
    %1450 = vmatpush1.msra.mxu0 0.0
    %1451 = vmatprep.subr.mxu0 0.0
    %1452 = vmatpush1.msra.mxu0 0.0
    %1453 = vmatprep.subr.mxu0 0.0
    %1454 = vmatpush1.msra.mxu0 0.0
    %1455 = vmatprep.subr.mxu0 0.0
    %1456 = vmatpush1.msra.mxu0 0.0
    %1457 = vmatprep.subr.mxu0 0.0
    %1458 = vmatpush1.msra.mxu0 0.0
    %1459 = vmatprep.subr.mxu0 0.0
    %1460 = vmatpush1.msra.mxu0 0.0
    %1461 = vmatprep.subr.mxu0 0.0
    %1462 = vmatpush1.msra.mxu0 0.0
    %1463 = vmatprep.subr.mxu0 0.0
    %1464 = vmatpush1.msra.mxu0 0.0
    %1465 = vmatprep.subr.mxu0 0.0
    %1466 = vmatpush1.msra.mxu0 0.0
    %1467 = vmatprep.subr.mxu0 0.0
    %1468 = vmatpush1.msra.mxu0 0.0
    %1469 = vmatprep.subr.mxu0 0.0
    %1470 = vmatpush1.msra.mxu0 0.0
    %1471 = vmatprep.subr.mxu0 0.0
    %1472 = vmatpush1.msra.mxu0 0.0
    %1473 = vmatprep.subr.mxu0 0.0
    %1474 = vmatpush1.msra.mxu0 0.0
    %1475 = vmatprep.subr.mxu0 0.0
    %1476 = vmatpush1.msra.mxu0 0.0
    %1477 = vmatprep.subr.mxu0 0.0
    %1478 = vmatpush1.msra.mxu0 0.0
    %1479 = vmatprep.subr.mxu0 0.0
    %1480 = vmatpush1.msra.mxu0 0.0
    %1481 = vmatprep.mubr.f32.mxu0 0.0
    %1482 = vmatmul.mubr.f32.gmra.mrb[0].mxu0 %v1415
    %v1483 = vpop.f32.mrb[0].mxu0
    %v1484 = vadd.f32 0.0, %v1483
    %v1485 = vpop.f32.mrb[0].mxu0
    %1486 = vdwg.mxu0
    %v1487 = vadd.f32 %v1413, %v1484
    %s1488 = sadd.s32 112, 8
    %s1489 = scalar_lea.vmem [#allocation2], %s1488
    %1490 = vst.msk [vmem:[%s1489] sm:$0xff] %vm259, %v1487
    %s1491 = scalar_lea.vmem [#allocation2], 120
    %v1492 = vld [vmem:[%s1491] sm:$0xff]
    %s1493 = scalar_lea.vmem [#allocation3], 120
    %v1494 = vld [vmem:[%s1493] sm:$0xff]
    %v1496 = vsel %vm259, %v1492, 0
    %1498 = vmatprep.subr.mxu0 0.0
    %1499 = vmatpush1.msra.mxu0 %v48
    %1500 = vmatprep.subr.mxu0 0.0
    %1501 = vmatpush1.msra.mxu0 %v49
    %1502 = vmatprep.subr.mxu0 0.0
    %1503 = vmatpush1.msra.mxu0 %v50
    %1504 = vmatprep.subr.mxu0 0.0
    %1505 = vmatpush1.msra.mxu0 %v51
    %1506 = vmatprep.subr.mxu0 0.0
    %1507 = vmatpush1.msra.mxu0 0.0
    %1508 = vmatprep.subr.mxu0 0.0
    %1509 = vmatpush1.msra.mxu0 0.0
    %1510 = vmatprep.subr.mxu0 0.0
    %1511 = vmatpush1.msra.mxu0 0.0
    %1512 = vmatprep.subr.mxu0 0.0
    %1513 = vmatpush1.msra.mxu0 0.0
    %1514 = vmatprep.subr.mxu0 0.0
    %1515 = vmatpush1.msra.mxu0 0.0
    %1516 = vmatprep.subr.mxu0 0.0
    %1517 = vmatpush1.msra.mxu0 0.0
    %1518 = vmatprep.subr.mxu0 0.0
    %1519 = vmatpush1.msra.mxu0 0.0
    %1520 = vmatprep.subr.mxu0 0.0
    %1521 = vmatpush1.msra.mxu0 0.0
    %1522 = vmatprep.subr.mxu0 0.0
    %1523 = vmatpush1.msra.mxu0 0.0
    %1524 = vmatprep.subr.mxu0 0.0
    %1525 = vmatpush1.msra.mxu0 0.0
    %1526 = vmatprep.subr.mxu0 0.0
    %1527 = vmatpush1.msra.mxu0 0.0
    %1528 = vmatprep.subr.mxu0 0.0
    %1529 = vmatpush1.msra.mxu0 0.0
    %1530 = vmatprep.subr.mxu0 0.0
    %1531 = vmatpush1.msra.mxu0 0.0
    %1532 = vmatprep.subr.mxu0 0.0
    %1533 = vmatpush1.msra.mxu0 0.0
    %1534 = vmatprep.subr.mxu0 0.0
    %1535 = vmatpush1.msra.mxu0 0.0
    %1536 = vmatprep.subr.mxu0 0.0
    %1537 = vmatpush1.msra.mxu0 0.0
    %1538 = vmatprep.subr.mxu0 0.0
    %1539 = vmatpush1.msra.mxu0 0.0
    %1540 = vmatprep.subr.mxu0 0.0
    %1541 = vmatpush1.msra.mxu0 0.0
    %1542 = vmatprep.subr.mxu0 0.0
    %1543 = vmatpush1.msra.mxu0 0.0
    %1544 = vmatprep.subr.mxu0 0.0
    %1545 = vmatpush1.msra.mxu0 0.0
    %1546 = vmatprep.subr.mxu0 0.0
    %1547 = vmatpush1.msra.mxu0 0.0
    %1548 = vmatprep.subr.mxu0 0.0
    %1549 = vmatpush1.msra.mxu0 0.0
    %1550 = vmatprep.subr.mxu0 0.0
    %1551 = vmatpush1.msra.mxu0 0.0
    %1552 = vmatprep.subr.mxu0 0.0
    %1553 = vmatpush1.msra.mxu0 0.0
    %1554 = vmatprep.subr.mxu0 0.0
    %1555 = vmatpush1.msra.mxu0 0.0
    %1556 = vmatprep.subr.mxu0 0.0
    %1557 = vmatpush1.msra.mxu0 0.0
    %1558 = vmatprep.subr.mxu0 0.0
    %1559 = vmatpush1.msra.mxu0 0.0
    %1560 = vmatprep.subr.mxu0 0.0
    %1561 = vmatpush1.msra.mxu0 0.0
    %1562 = vmatprep.mubr.f32.mxu0 0.0
    %1563 = vmatmul.mubr.f32.gmra.mrb[0].mxu0 %v1496
    %v1564 = vpop.f32.mrb[0].mxu0
    %v1565 = vadd.f32 0.0, %v1564
    %v1566 = vpop.f32.mrb[0].mxu0
    %1567 = vdwg.mxu0
    %v1568 = vadd.f32 %v1494, %v1565
    %s1569 = sadd.s32 120, 8
    %s1570 = scalar_lea.vmem [#allocation2], %s1569
    %1571 = vst.msk [vmem:[%s1570] sm:$0xff] %vm259, %v1568
    %v1572 = vld [vmem:[#allocation2] sm:$0xff]
    %v1573 = vld [vmem:[#allocation2 + $0x8] sm:$0xff]
    %v1574 = vld [vmem:[#allocation2 + $0x10] sm:$0xff]
    %v1575 = vld [vmem:[#allocation2 + $0x18] sm:$0xff]
    %v1576 = vld [vmem:[#allocation2 + $0x20] sm:$0xff]
    %v1577 = vld [vmem:[#allocation2 + $0x28] sm:$0xff]
    %v1578 = vld [vmem:[#allocation2 + $0x30] sm:$0xff]
    %v1579 = vld [vmem:[#allocation2 + $0x38] sm:$0xff]
    %v1580 = vld [vmem:[#allocation2 + $0x40] sm:$0xff]
    %v1581 = vld [vmem:[#allocation2 + $0x48] sm:$0xff]
    %v1582 = vld [vmem:[#allocation2 + $0x50] sm:$0xff]
    %v1583 = vld [vmem:[#allocation2 + $0x58] sm:$0xff]
    %v1584 = vld [vmem:[#allocation2 + $0x60] sm:$0xff]
    %v1585 = vld [vmem:[#allocation2 + $0x68] sm:$0xff]
    %v1586 = vld [vmem:[#allocation2 + $0x70] sm:$0xff]
    %v1587 = vld [vmem:[#allocation2 + $0x78] sm:$0xff]
    %v1588 = vld [vmem:[%s5] sm:$0xff]
    %v1589 = vld [vmem:[%s5 + $0x8] sm:$0x3]
    %v1590 = vld [vmem:[%s6] sm:$0xff]
    %v1591 = vld [vmem:[%s6 + $0x8] sm:$0xff]
    %v1592 = vld [vmem:[%s6 + $0x10] sm:$0xff]
    %v1593 = vld [vmem:[%s6 + $0x18] sm:$0xff]
    %v1595 = vsel %vm259, %v1572, 0
    %v1598 = vsel %vm259, %v1573, 0
    %v1601 = vsel %vm259, %v1574, 0
    %v1604 = vsel %vm259, %v1575, 0
    %v1607 = vsel %vm259, %v1576, 0
    %v1610 = vsel %vm259, %v1577, 0
    %v1613 = vsel %vm259, %v1578, 0
    %v1616 = vsel %vm259, %v1579, 0
    %v1619 = vsel %vm259, %v1580, 0
    %v1622 = vsel %vm259, %v1581, 0
    %v1625 = vsel %vm259, %v1582, 0
    %v1628 = vsel %vm259, %v1583, 0
    %v1631 = vsel %vm259, %v1584, 0
    %v1634 = vsel %vm259, %v1585, 0
    %v1637 = vsel %vm259, %v1586, 0
    %v1640 = vsel %vm259, %v1587, 0
    %1642 = vmatprep.subr.mxu0 0.0
    %1643 = vmatpush1.msra.mxu0 %v1590
    %1644 = vmatprep.subr.mxu0 0.0
    %1645 = vmatpush1.msra.mxu0 %v1591
    %1646 = vmatprep.subr.mxu0 0.0
    %1647 = vmatpush1.msra.mxu0 %v1592
    %1648 = vmatprep.subr.mxu0 0.0
    %1649 = vmatpush1.msra.mxu0 %v1593
    %1650 = vmatprep.subr.mxu0 0.0
    %1651 = vmatpush1.msra.mxu0 0.0
    %1652 = vmatprep.subr.mxu0 0.0
    %1653 = vmatpush1.msra.mxu0 0.0
    %1654 = vmatprep.subr.mxu0 0.0
    %1655 = vmatpush1.msra.mxu0 0.0
    %1656 = vmatprep.subr.mxu0 0.0
    %1657 = vmatpush1.msra.mxu0 0.0
    %1658 = vmatprep.subr.mxu0 0.0
    %1659 = vmatpush1.msra.mxu0 0.0
    %1660 = vmatprep.subr.mxu0 0.0
    %1661 = vmatpush1.msra.mxu0 0.0
    %1662 = vmatprep.subr.mxu0 0.0
    %1663 = vmatpush1.msra.mxu0 0.0
    %1664 = vmatprep.subr.mxu0 0.0
    %1665 = vmatpush1.msra.mxu0 0.0
    %1666 = vmatprep.subr.mxu0 0.0
    %1667 = vmatpush1.msra.mxu0 0.0
    %1668 = vmatprep.subr.mxu0 0.0
    %1669 = vmatpush1.msra.mxu0 0.0
    %1670 = vmatprep.subr.mxu0 0.0
    %1671 = vmatpush1.msra.mxu0 0.0
    %1672 = vmatprep.subr.mxu0 0.0
    %1673 = vmatpush1.msra.mxu0 0.0
    %1674 = vmatprep.subr.mxu0 0.0
    %1675 = vmatpush1.msra.mxu0 0.0
    %1676 = vmatprep.subr.mxu0 0.0
    %1677 = vmatpush1.msra.mxu0 0.0
    %1678 = vmatprep.subr.mxu0 0.0
    %1679 = vmatpush1.msra.mxu0 0.0
    %1680 = vmatprep.subr.mxu0 0.0
    %1681 = vmatpush1.msra.mxu0 0.0
    %1682 = vmatprep.subr.mxu0 0.0
    %1683 = vmatpush1.msra.mxu0 0.0
    %1684 = vmatprep.subr.mxu0 0.0
    %1685 = vmatpush1.msra.mxu0 0.0
    %1686 = vmatprep.subr.mxu0 0.0
    %1687 = vmatpush1.msra.mxu0 0.0
    %1688 = vmatprep.subr.mxu0 0.0
    %1689 = vmatpush1.msra.mxu0 0.0
    %1690 = vmatprep.subr.mxu0 0.0
    %1691 = vmatpush1.msra.mxu0 0.0
    %1692 = vmatprep.subr.mxu0 0.0
    %1693 = vmatpush1.msra.mxu0 0.0
    %1694 = vmatprep.subr.mxu0 0.0
    %1695 = vmatpush1.msra.mxu0 0.0
    %1696 = vmatprep.subr.mxu0 0.0
    %1697 = vmatpush1.msra.mxu0 0.0
    %1698 = vmatprep.subr.mxu0 0.0
    %1699 = vmatpush1.msra.mxu0 0.0
    %1700 = vmatprep.subr.mxu0 0.0
    %1701 = vmatpush1.msra.mxu0 0.0
    %1702 = vmatprep.subr.mxu0 0.0
    %1703 = vmatpush1.msra.mxu0 0.0
    %1704 = vmatprep.subr.mxu0 0.0
    %1705 = vmatpush1.msra.mxu0 0.0
    %1706 = vmatprep.mubr.f32.mxu0 0.0
    %1707 = vmatmul.mubr.f32.gmra.mrb[0].mxu0 %v1595
    %v1708 = vpop.f32.mrb[0].mxu0
    %v1709 = vadd.f32 0.0, %v1708
    %v1710 = vpop.f32.mrb[0].mxu0
    %1711 = vmatprep.mubr.f32.mxu0 0.0
    %1712 = vmatmul.mubr.f32.gmra.mrb[0].mxu0 %v1598
    %v1713 = vpop.f32.mrb[0].mxu0
    %v1714 = vadd.f32 0.0, %v1713
    %v1715 = vpop.f32.mrb[0].mxu0
    %1716 = vmatprep.mubr.f32.mxu0 0.0
    %1717 = vmatmul.mubr.f32.gmra.mrb[0].mxu0 %v1601
    %v1718 = vpop.f32.mrb[0].mxu0
    %v1719 = vadd.f32 0.0, %v1718
    %v1720 = vpop.f32.mrb[0].mxu0
    %1721 = vmatprep.mubr.f32.mxu0 0.0
    %1722 = vmatmul.mubr.f32.gmra.mrb[0].mxu0 %v1604
    %v1723 = vpop.f32.mrb[0].mxu0
    %v1724 = vadd.f32 0.0, %v1723
    %v1725 = vpop.f32.mrb[0].mxu0
    %1726 = vmatprep.mubr.f32.mxu0 0.0
    %1727 = vmatmul.mubr.f32.gmra.mrb[0].mxu0 %v1607
    %v1728 = vpop.f32.mrb[0].mxu0
    %v1729 = vadd.f32 0.0, %v1728
    %v1730 = vpop.f32.mrb[0].mxu0
    %1731 = vmatprep.mubr.f32.mxu0 0.0
    %1732 = vmatmul.mubr.f32.gmra.mrb[0].mxu0 %v1610
    %v1733 = vpop.f32.mrb[0].mxu0
    %v1734 = vadd.f32 0.0, %v1733
    %v1735 = vpop.f32.mrb[0].mxu0
    %1736 = vmatprep.mubr.f32.mxu0 0.0
    %1737 = vmatmul.mubr.f32.gmra.mrb[0].mxu0 %v1613
    %v1738 = vpop.f32.mrb[0].mxu0
    %v1739 = vadd.f32 0.0, %v1738
    %v1740 = vpop.f32.mrb[0].mxu0
    %1741 = vmatprep.mubr.f32.mxu0 0.0
    %1742 = vmatmul.mubr.f32.gmra.mrb[0].mxu0 %v1616
    %v1743 = vpop.f32.mrb[0].mxu0
    %v1744 = vadd.f32 0.0, %v1743
    %v1745 = vpop.f32.mrb[0].mxu0
    %1746 = vmatprep.mubr.f32.mxu0 0.0
    %1747 = vmatmul.mubr.f32.gmra.mrb[0].mxu0 %v1619
    %v1748 = vpop.f32.mrb[0].mxu0
    %v1749 = vadd.f32 0.0, %v1748
    %v1750 = vpop.f32.mrb[0].mxu0
    %1751 = vmatprep.mubr.f32.mxu0 0.0
    %1752 = vmatmul.mubr.f32.gmra.mrb[0].mxu0 %v1622
    %v1753 = vpop.f32.mrb[0].mxu0
    %v1754 = vadd.f32 0.0, %v1753
    %v1755 = vpop.f32.mrb[0].mxu0
    %1756 = vmatprep.mubr.f32.mxu0 0.0
    %1757 = vmatmul.mubr.f32.gmra.mrb[0].mxu0 %v1625
    %v1758 = vpop.f32.mrb[0].mxu0
    %v1759 = vadd.f32 0.0, %v1758
    %v1760 = vpop.f32.mrb[0].mxu0
    %1761 = vmatprep.mubr.f32.mxu0 0.0
    %1762 = vmatmul.mubr.f32.gmra.mrb[0].mxu0 %v1628
    %v1763 = vpop.f32.mrb[0].mxu0
    %v1764 = vadd.f32 0.0, %v1763
    %v1765 = vpop.f32.mrb[0].mxu0
    %1766 = vmatprep.mubr.f32.mxu0 0.0
    %1767 = vmatmul.mubr.f32.gmra.mrb[0].mxu0 %v1631
    %v1768 = vpop.f32.mrb[0].mxu0
    %v1769 = vadd.f32 0.0, %v1768
    %v1770 = vpop.f32.mrb[0].mxu0
    %1771 = vmatprep.mubr.f32.mxu0 0.0
    %1772 = vmatmul.mubr.f32.gmra.mrb[0].mxu0 %v1634
    %v1773 = vpop.f32.mrb[0].mxu0
    %v1774 = vadd.f32 0.0, %v1773
    %v1775 = vpop.f32.mrb[0].mxu0
    %1776 = vmatprep.mubr.f32.mxu0 0.0
    %1777 = vmatmul.mubr.f32.gmra.mrb[0].mxu0 %v1637
    %v1778 = vpop.f32.mrb[0].mxu0
    %v1779 = vadd.f32 0.0, %v1778
    %v1780 = vpop.f32.mrb[0].mxu0
    %1781 = vmatprep.mubr.f32.mxu0 0.0
    %1782 = vmatmul.mubr.f32.gmra.mrb[0].mxu0 %v1640
    %v1783 = vpop.f32.mrb[0].mxu0
    %v1784 = vadd.f32 0.0, %v1783
    %v1785 = vpop.f32.mrb[0].mxu0
    %1786 = vdwg.mxu0
    %v1788 = vsel %vm110, %v1589, 0
    %1790 = vmatprep.subr.mxu0 0.0
    %1791 = vmatpush1.msra.mxu0 %v1588
    %1792 = vmatprep.subr.mxu0 0.0
    %1793 = vmatpush1.msra.mxu0 %v1788
    %1794 = vmatprep.subr.mxu0 0.0
    %1795 = vmatpush1.msra.mxu0 0.0
    %1796 = vmatprep.subr.mxu0 0.0
    %1797 = vmatpush1.msra.mxu0 0.0
    %1798 = vmatprep.subr.mxu0 0.0
    %1799 = vmatpush1.msra.mxu0 0.0
    %1800 = vmatprep.subr.mxu0 0.0
    %1801 = vmatpush1.msra.mxu0 0.0
    %1802 = vmatprep.subr.mxu0 0.0
    %1803 = vmatpush1.msra.mxu0 0.0
    %1804 = vmatprep.subr.mxu0 0.0
    %1805 = vmatpush1.msra.mxu0 0.0
    %1806 = vmatprep.subr.mxu0 0.0
    %1807 = vmatpush1.msra.mxu0 0.0
    %1808 = vmatprep.subr.mxu0 0.0
    %1809 = vmatpush1.msra.mxu0 0.0
    %1810 = vmatprep.subr.mxu0 0.0
    %1811 = vmatpush1.msra.mxu0 0.0
    %1812 = vmatprep.subr.mxu0 0.0
    %1813 = vmatpush1.msra.mxu0 0.0
    %1814 = vmatprep.subr.mxu0 0.0
    %1815 = vmatpush1.msra.mxu0 0.0
    %1816 = vmatprep.subr.mxu0 0.0
    %1817 = vmatpush1.msra.mxu0 0.0
    %1818 = vmatprep.subr.mxu0 0.0
    %1819 = vmatpush1.msra.mxu0 0.0
    %1820 = vmatprep.subr.mxu0 0.0
    %1821 = vmatpush1.msra.mxu0 0.0
    %1822 = vmatprep.subr.mxu0 0.0
    %1823 = vmatpush1.msra.mxu0 0.0
    %1824 = vmatprep.subr.mxu0 0.0
    %1825 = vmatpush1.msra.mxu0 0.0
    %1826 = vmatprep.subr.mxu0 0.0
    %1827 = vmatpush1.msra.mxu0 0.0
    %1828 = vmatprep.subr.mxu0 0.0
    %1829 = vmatpush1.msra.mxu0 0.0
    %1830 = vmatprep.subr.mxu0 0.0
    %1831 = vmatpush1.msra.mxu0 0.0
    %1832 = vmatprep.subr.mxu0 0.0
    %1833 = vmatpush1.msra.mxu0 0.0
    %1834 = vmatprep.subr.mxu0 0.0
    %1835 = vmatpush1.msra.mxu0 0.0
    %1836 = vmatprep.subr.mxu0 0.0
    %1837 = vmatpush1.msra.mxu0 0.0
    %1838 = vmatprep.subr.mxu0 0.0
    %1839 = vmatpush1.msra.mxu0 0.0
    %1840 = vmatprep.subr.mxu0 0.0
    %1841 = vmatpush1.msra.mxu0 0.0
    %1842 = vmatprep.subr.mxu0 0.0
    %1843 = vmatpush1.msra.mxu0 0.0
    %1844 = vmatprep.subr.mxu0 0.0
    %1845 = vmatpush1.msra.mxu0 0.0
    %1846 = vmatprep.subr.mxu0 0.0
    %1847 = vmatpush1.msra.mxu0 0.0
    %1848 = vmatprep.subr.mxu0 0.0
    %1849 = vmatpush1.msra.mxu0 0.0
    %1850 = vmatprep.subr.mxu0 0.0
    %1851 = vmatpush1.msra.mxu0 0.0
    %1852 = vmatprep.subr.mxu0 0.0
    %1853 = vmatpush1.msra.mxu0 0.0
    %1854 = vmatprep.mubr.f32.mxu0 0.0
    %1855 = vmatmul.mubr.f32.gmra.mrb[0].mxu0 %v63
    %v1856 = vpop.f32.mrb[0].mxu0
    %v1857 = vadd.f32 %v1709, %v1856
    %v1858 = vpop.f32.mrb[0].mxu0
    %1859 = vmatprep.mubr.f32.mxu0 0.0
    %1860 = vmatmul.mubr.f32.gmra.mrb[0].mxu0 %v66
    %v1861 = vpop.f32.mrb[0].mxu0
    %v1862 = vadd.f32 %v1714, %v1861
    %v1863 = vpop.f32.mrb[0].mxu0
    %1864 = vmatprep.mubr.f32.mxu0 0.0
    %1865 = vmatmul.mubr.f32.gmra.mrb[0].mxu0 %v69
    %v1866 = vpop.f32.mrb[0].mxu0
    %v1867 = vadd.f32 %v1719, %v1866
    %v1868 = vpop.f32.mrb[0].mxu0
    %1869 = vmatprep.mubr.f32.mxu0 0.0
    %1870 = vmatmul.mubr.f32.gmra.mrb[0].mxu0 %v72
    %v1871 = vpop.f32.mrb[0].mxu0
    %v1872 = vadd.f32 %v1724, %v1871
    %v1873 = vpop.f32.mrb[0].mxu0
    %1874 = vmatprep.mubr.f32.mxu0 0.0
    %1875 = vmatmul.mubr.f32.gmra.mrb[0].mxu0 %v75
    %v1876 = vpop.f32.mrb[0].mxu0
    %v1877 = vadd.f32 %v1729, %v1876
    %v1878 = vpop.f32.mrb[0].mxu0
    %1879 = vmatprep.mubr.f32.mxu0 0.0
    %1880 = vmatmul.mubr.f32.gmra.mrb[0].mxu0 %v78
    %v1881 = vpop.f32.mrb[0].mxu0
    %v1882 = vadd.f32 %v1734, %v1881
    %v1883 = vpop.f32.mrb[0].mxu0
    %1884 = vmatprep.mubr.f32.mxu0 0.0
    %1885 = vmatmul.mubr.f32.gmra.mrb[0].mxu0 %v81
    %v1886 = vpop.f32.mrb[0].mxu0
    %v1887 = vadd.f32 %v1739, %v1886
    %v1888 = vpop.f32.mrb[0].mxu0
    %1889 = vmatprep.mubr.f32.mxu0 0.0
    %1890 = vmatmul.mubr.f32.gmra.mrb[0].mxu0 %v84
    %v1891 = vpop.f32.mrb[0].mxu0
    %v1892 = vadd.f32 %v1744, %v1891
    %v1893 = vpop.f32.mrb[0].mxu0
    %1894 = vmatprep.mubr.f32.mxu0 0.0
    %1895 = vmatmul.mubr.f32.gmra.mrb[0].mxu0 %v87
    %v1896 = vpop.f32.mrb[0].mxu0
    %v1897 = vadd.f32 %v1749, %v1896
    %v1898 = vpop.f32.mrb[0].mxu0
    %1899 = vmatprep.mubr.f32.mxu0 0.0
    %1900 = vmatmul.mubr.f32.gmra.mrb[0].mxu0 %v90
    %v1901 = vpop.f32.mrb[0].mxu0
    %v1902 = vadd.f32 %v1754, %v1901
    %v1903 = vpop.f32.mrb[0].mxu0
    %1904 = vmatprep.mubr.f32.mxu0 0.0
    %1905 = vmatmul.mubr.f32.gmra.mrb[0].mxu0 %v93
    %v1906 = vpop.f32.mrb[0].mxu0
    %v1907 = vadd.f32 %v1759, %v1906
    %v1908 = vpop.f32.mrb[0].mxu0
    %1909 = vmatprep.mubr.f32.mxu0 0.0
    %1910 = vmatmul.mubr.f32.gmra.mrb[0].mxu0 %v96
    %v1911 = vpop.f32.mrb[0].mxu0
    %v1912 = vadd.f32 %v1764, %v1911
    %v1913 = vpop.f32.mrb[0].mxu0
    %1914 = vmatprep.mubr.f32.mxu0 0.0
    %1915 = vmatmul.mubr.f32.gmra.mrb[0].mxu0 %v99
    %v1916 = vpop.f32.mrb[0].mxu0
    %v1917 = vadd.f32 %v1769, %v1916
    %v1918 = vpop.f32.mrb[0].mxu0
    %1919 = vmatprep.mubr.f32.mxu0 0.0
    %1920 = vmatmul.mubr.f32.gmra.mrb[0].mxu0 %v102
    %v1921 = vpop.f32.mrb[0].mxu0
    %v1922 = vadd.f32 %v1774, %v1921
    %v1923 = vpop.f32.mrb[0].mxu0
    %1924 = vmatprep.mubr.f32.mxu0 0.0
    %1925 = vmatmul.mubr.f32.gmra.mrb[0].mxu0 %v105
    %v1926 = vpop.f32.mrb[0].mxu0
    %v1927 = vadd.f32 %v1779, %v1926
    %v1928 = vpop.f32.mrb[0].mxu0
    %1929 = vmatprep.mubr.f32.mxu0 0.0
    %1930 = vmatmul.mubr.f32.gmra.mrb[0].mxu0 %v108
    %v1931 = vpop.f32.mrb[0].mxu0
    %v1932 = vadd.f32 %v1784, %v1931
    %v1933 = vpop.f32.mrb[0].mxu0
    %1934 = vdwg.mxu0
    %v1935 = vld [vmem:[%s7] sm:$0x1]
    %v1937 = vlaneseq
    %v1938 = vshrl.u32 %v1937, 7
    %v1939 = vsub.s32 0, %v1938
    %v1940 = vrot.slane %v1935, %v1939
    %v1942 = vadd.f32 %v1857, %v1940
    %v1943 = vadd.f32 %v1862, %v1940
    %v1944 = vadd.f32 %v1867, %v1940
    %v1945 = vadd.f32 %v1872, %v1940
    %v1946 = vadd.f32 %v1877, %v1940
    %v1947 = vadd.f32 %v1882, %v1940
    %v1948 = vadd.f32 %v1887, %v1940
    %v1949 = vadd.f32 %v1892, %v1940
    %v1950 = vadd.f32 %v1897, %v1940
    %v1951 = vadd.f32 %v1902, %v1940
    %v1952 = vadd.f32 %v1907, %v1940
    %v1953 = vadd.f32 %v1912, %v1940
    %v1954 = vadd.f32 %v1917, %v1940
    %v1955 = vadd.f32 %v1922, %v1940
    %v1956 = vadd.f32 %v1927, %v1940
    %v1957 = vadd.f32 %v1932, %v1940
    %vm1958 = vcmask 130048
    %v1959 = vsel %vm1958, %v1942, -inf
    %1960 = vmax.xlane.f32.xlu0 %v1959
    %v1961 = vpop.xlane.xlu0 %1960
    %v1962 = vsel %vm1958, %v1943, -inf
    %1963 = vmax.xlane.f32.xlu0 %v1962
    %v1964 = vpop.xlane.xlu0 %1963
    %v1965 = vsel %vm1958, %v1944, -inf
    %1966 = vmax.xlane.f32.xlu0 %v1965
    %v1967 = vpop.xlane.xlu0 %1966
    %v1968 = vsel %vm1958, %v1945, -inf
    %1969 = vmax.xlane.f32.xlu0 %v1968
    %v1970 = vpop.xlane.xlu0 %1969
    %v1971 = vsel %vm1958, %v1946, -inf
    %1972 = vmax.xlane.f32.xlu0 %v1971
    %v1973 = vpop.xlane.xlu0 %1972
    %v1974 = vsel %vm1958, %v1947, -inf
    %1975 = vmax.xlane.f32.xlu0 %v1974
    %v1976 = vpop.xlane.xlu0 %1975
    %v1977 = vsel %vm1958, %v1948, -inf
    %1978 = vmax.xlane.f32.xlu0 %v1977
    %v1979 = vpop.xlane.xlu0 %1978
    %v1980 = vsel %vm1958, %v1949, -inf
    %1981 = vmax.xlane.f32.xlu0 %v1980
    %v1982 = vpop.xlane.xlu0 %1981
    %v1983 = vsel %vm1958, %v1950, -inf
    %1984 = vmax.xlane.f32.xlu0 %v1983
    %v1985 = vpop.xlane.xlu0 %1984
    %v1986 = vsel %vm1958, %v1951, -inf
    %1987 = vmax.xlane.f32.xlu0 %v1986
    %v1988 = vpop.xlane.xlu0 %1987
    %v1989 = vsel %vm1958, %v1952, -inf
    %1990 = vmax.xlane.f32.xlu0 %v1989
    %v1991 = vpop.xlane.xlu0 %1990
    %v1992 = vsel %vm1958, %v1953, -inf
    %1993 = vmax.xlane.f32.xlu0 %v1992
    %v1994 = vpop.xlane.xlu0 %1993
    %v1995 = vsel %vm1958, %v1954, -inf
    %1996 = vmax.xlane.f32.xlu0 %v1995
    %v1997 = vpop.xlane.xlu0 %1996
    %v1998 = vsel %vm1958, %v1955, -inf
    %1999 = vmax.xlane.f32.xlu0 %v1998
    %v2000 = vpop.xlane.xlu0 %1999
    %v2001 = vsel %vm1958, %v1956, -inf
    %2002 = vmax.xlane.f32.xlu0 %v2001
    %v2003 = vpop.xlane.xlu0 %2002
    %v2004 = vsel %vm1958, %v1957, -inf
    %2005 = vmax.xlane.f32.xlu0 %v2004
    %v2006 = vpop.xlane.xlu0 %2005
    %v2007 = vsub.f32 %v1942, %v1961
    %v2008 = vsub.f32 %v1943, %v1964
    %v2009 = vsub.f32 %v1944, %v1967
    %v2010 = vsub.f32 %v1945, %v1970
    %v2011 = vsub.f32 %v1946, %v1973
    %v2012 = vsub.f32 %v1947, %v1976
    %v2013 = vsub.f32 %v1948, %v1979
    %v2014 = vsub.f32 %v1949, %v1982
    %v2015 = vsub.f32 %v1950, %v1985
    %v2016 = vsub.f32 %v1951, %v1988
    %v2017 = vsub.f32 %v1952, %v1991
    %v2018 = vsub.f32 %v1953, %v1994
    %v2019 = vsub.f32 %v1954, %v1997
    %v2020 = vsub.f32 %v1955, %v2000
    %v2021 = vsub.f32 %v1956, %v2003
    %v2022 = vsub.f32 %v1957, %v2006
    %v2023 = vmul.f32 %v2007, 1.442695
    %v2024 = vpow.pop %v2023
    %v2025 = vmul.f32 %v2008, 1.442695
    %v2026 = vpow.pop %v2025
    %v2027 = vmul.f32 %v2009, 1.442695
    %v2028 = vpow.pop %v2027
    %v2029 = vmul.f32 %v2010, 1.442695
    %v2030 = vpow.pop %v2029
    %v2031 = vmul.f32 %v2011, 1.442695
    %v2032 = vpow.pop %v2031
    %v2033 = vmul.f32 %v2012, 1.442695
    %v2034 = vpow.pop %v2033
    %v2035 = vmul.f32 %v2013, 1.442695
    %v2036 = vpow.pop %v2035
    %v2037 = vmul.f32 %v2014, 1.442695
    %v2038 = vpow.pop %v2037
    %v2039 = vmul.f32 %v2015, 1.442695
    %v2040 = vpow.pop %v2039
    %v2041 = vmul.f32 %v2016, 1.442695
    %v2042 = vpow.pop %v2041
    %v2043 = vmul.f32 %v2017, 1.442695
    %v2044 = vpow.pop %v2043
    %v2045 = vmul.f32 %v2018, 1.442695
    %v2046 = vpow.pop %v2045
    %v2047 = vmul.f32 %v2019, 1.442695
    %v2048 = vpow.pop %v2047
    %v2049 = vmul.f32 %v2020, 1.442695
    %v2050 = vpow.pop %v2049
    %v2051 = vmul.f32 %v2021, 1.442695
    %v2052 = vpow.pop %v2051
    %v2053 = vmul.f32 %v2022, 1.442695
    %v2054 = vpow.pop %v2053
    %v2055 = vsel %vm1958, %v2024, 0.0
    %2056 = vadd.xlane.f32.xlu0 %v2055
    %v2057 = vpop.xlane.xlu0 %2056
    %v2058 = vsel %vm1958, %v2026, 0.0
    %2059 = vadd.xlane.f32.xlu0 %v2058
    %v2060 = vpop.xlane.xlu0 %2059
    %v2061 = vsel %vm1958, %v2028, 0.0
    %2062 = vadd.xlane.f32.xlu0 %v2061
    %v2063 = vpop.xlane.xlu0 %2062
    %v2064 = vsel %vm1958, %v2030, 0.0
    %2065 = vadd.xlane.f32.xlu0 %v2064
    %v2066 = vpop.xlane.xlu0 %2065
    %v2067 = vsel %vm1958, %v2032, 0.0
    %2068 = vadd.xlane.f32.xlu0 %v2067
    %v2069 = vpop.xlane.xlu0 %2068
    %v2070 = vsel %vm1958, %v2034, 0.0
    %2071 = vadd.xlane.f32.xlu0 %v2070
    %v2072 = vpop.xlane.xlu0 %2071
    %v2073 = vsel %vm1958, %v2036, 0.0
    %2074 = vadd.xlane.f32.xlu0 %v2073
    %v2075 = vpop.xlane.xlu0 %2074
    %v2076 = vsel %vm1958, %v2038, 0.0
    %2077 = vadd.xlane.f32.xlu0 %v2076
    %v2078 = vpop.xlane.xlu0 %2077
    %v2079 = vsel %vm1958, %v2040, 0.0
    %2080 = vadd.xlane.f32.xlu0 %v2079
    %v2081 = vpop.xlane.xlu0 %2080
    %v2082 = vsel %vm1958, %v2042, 0.0
    %2083 = vadd.xlane.f32.xlu0 %v2082
    %v2084 = vpop.xlane.xlu0 %2083
    %v2085 = vsel %vm1958, %v2044, 0.0
    %2086 = vadd.xlane.f32.xlu0 %v2085
    %v2087 = vpop.xlane.xlu0 %2086
    %v2088 = vsel %vm1958, %v2046, 0.0
    %2089 = vadd.xlane.f32.xlu0 %v2088
    %v2090 = vpop.xlane.xlu0 %2089
    %v2091 = vsel %vm1958, %v2048, 0.0
    %2092 = vadd.xlane.f32.xlu0 %v2091
    %v2093 = vpop.xlane.xlu0 %2092
    %v2094 = vsel %vm1958, %v2050, 0.0
    %2095 = vadd.xlane.f32.xlu0 %v2094
    %v2096 = vpop.xlane.xlu0 %2095
    %v2097 = vsel %vm1958, %v2052, 0.0
    %2098 = vadd.xlane.f32.xlu0 %v2097
    %v2099 = vpop.xlane.xlu0 %2098
    %v2100 = vsel %vm1958, %v2054, 0.0
    %2101 = vadd.xlane.f32.xlu0 %v2100
    %v2102 = vpop.xlane.xlu0 %2101
    %v2103 = vlog2.pop %v2057
    %v2104 = vmul.f32 %v2103, 0.6931472
    %v2105 = vlog2.pop %v2060
    %v2106 = vmul.f32 %v2105, 0.6931472
    %v2107 = vlog2.pop %v2063
    %v2108 = vmul.f32 %v2107, 0.6931472
    %v2109 = vlog2.pop %v2066
    %v2110 = vmul.f32 %v2109, 0.6931472
    %v2111 = vlog2.pop %v2069
    %v2112 = vmul.f32 %v2111, 0.6931472
    %v2113 = vlog2.pop %v2072
    %v2114 = vmul.f32 %v2113, 0.6931472
    %v2115 = vlog2.pop %v2075
    %v2116 = vmul.f32 %v2115, 0.6931472
    %v2117 = vlog2.pop %v2078
    %v2118 = vmul.f32 %v2117, 0.6931472
    %v2119 = vlog2.pop %v2081
    %v2120 = vmul.f32 %v2119, 0.6931472
    %v2121 = vlog2.pop %v2084
    %v2122 = vmul.f32 %v2121, 0.6931472
    %v2123 = vlog2.pop %v2087
    %v2124 = vmul.f32 %v2123, 0.6931472
    %v2125 = vlog2.pop %v2090
    %v2126 = vmul.f32 %v2125, 0.6931472
    %v2127 = vlog2.pop %v2093
    %v2128 = vmul.f32 %v2127, 0.6931472
    %v2129 = vlog2.pop %v2096
    %v2130 = vmul.f32 %v2129, 0.6931472
    %v2131 = vlog2.pop %v2099
    %v2132 = vmul.f32 %v2131, 0.6931472
    %v2133 = vlog2.pop %v2102
    %v2134 = vmul.f32 %v2133, 0.6931472
    %v2135 = vadd.f32 %v1961, %v2104
    %v2136 = vadd.f32 %v1964, %v2106
    %v2137 = vadd.f32 %v1967, %v2108
    %v2138 = vadd.f32 %v1970, %v2110
    %v2139 = vadd.f32 %v1973, %v2112
    %v2140 = vadd.f32 %v1976, %v2114
    %v2141 = vadd.f32 %v1979, %v2116
    %v2142 = vadd.f32 %v1982, %v2118
    %v2143 = vadd.f32 %v1985, %v2120
    %v2144 = vadd.f32 %v1988, %v2122
    %v2145 = vadd.f32 %v1991, %v2124
    %v2146 = vadd.f32 %v1994, %v2126
    %v2147 = vadd.f32 %v1997, %v2128
    %v2148 = vadd.f32 %v2000, %v2130
    %v2149 = vadd.f32 %v2003, %v2132
    %v2150 = vadd.f32 %v2006, %v2134
    %v2151 = vsub.f32 %v1942, %v2135
    %v2152 = vsub.f32 %v1943, %v2136
    %v2153 = vsub.f32 %v1944, %v2137
    %v2154 = vsub.f32 %v1945, %v2138
    %v2155 = vsub.f32 %v1946, %v2139
    %v2156 = vsub.f32 %v1947, %v2140
    %v2157 = vsub.f32 %v1948, %v2141
    %v2158 = vsub.f32 %v1949, %v2142
    %v2159 = vsub.f32 %v1950, %v2143
    %v2160 = vsub.f32 %v1951, %v2144
    %v2161 = vsub.f32 %v1952, %v2145
    %v2162 = vsub.f32 %v1953, %v2146
    %v2163 = vsub.f32 %v1954, %v2147
    %v2164 = vsub.f32 %v1955, %v2148
    %v2165 = vsub.f32 %v1956, %v2149
    %v2166 = vsub.f32 %v1957, %v2150
    %2167 = vst.msk [vmem:[#allocation4] sm:$0xff] %vm1958, %v2151
    %2168 = vst.msk [vmem:[#allocation4 + $0x8] sm:$0xff] %vm1958, %v2152
    %2169 = vst.msk [vmem:[#allocation4 + $0x10] sm:$0xff] %vm1958, %v2153
    %2170 = vst.msk [vmem:[#allocation4 + $0x18] sm:$0xff] %vm1958, %v2154
    %2171 = vst.msk [vmem:[#allocation4 + $0x20] sm:$0xff] %vm1958, %v2155
    %2172 = vst.msk [vmem:[#allocation4 + $0x28] sm:$0xff] %vm1958, %v2156
    %2173 = vst.msk [vmem:[#allocation4 + $0x30] sm:$0xff] %vm1958, %v2157
    %2174 = vst.msk [vmem:[#allocation4 + $0x38] sm:$0xff] %vm1958, %v2158
    %2175 = vst.msk [vmem:[#allocation4 + $0x40] sm:$0xff] %vm1958, %v2159
    %2176 = vst.msk [vmem:[#allocation4 + $0x48] sm:$0xff] %vm1958, %v2160
    %2177 = vst.msk [vmem:[#allocation4 + $0x50] sm:$0xff] %vm1958, %v2161
    %2178 = vst.msk [vmem:[#allocation4 + $0x58] sm:$0xff] %vm1958, %v2162
    %2179 = vst.msk [vmem:[#allocation4 + $0x60] sm:$0xff] %vm1958, %v2163
    %2180 = vst.msk [vmem:[#allocation4 + $0x68] sm:$0xff] %vm1958, %v2164
    %2181 = vst.msk [vmem:[#allocation4 + $0x70] sm:$0xff] %vm1958, %v2165
    %2182 = vst.msk [vmem:[#allocation4 + $0x78] sm:$0xff] %vm1958, %v2166
    %v2183 = vld [vmem:[#allocation2 + $0x80] sm:$0xff]
    %2184 = vst.msk [vmem:[%s9] sm:$0xff] %vm259, %v2183
    // Predicated region
    $region34: #{rnn_sequence.1} parent=1 // pred_check
      _
    $region35: #{rnn_sequence.1} parent=1 // pred_check_branch
      %2186 = sbr.rel (0) target = $region37
    $region36: #{rnn_sequence.1} parent=1 // pred_region
      %s2188 = ssub.s32 2048, 2048
      %2189 = vsyncadd [#allocation5], %s2188
      %s2190 = sshll.u32 [#allocation4], 4
      %s2191 = int_to_ptr.vmem [resolvable:$true] %s2190
      %2196 = dma.vmem_to_hbm [thread:$0]  %s2191, 2048, %s8, [#allocation5], 128, 128, 8
    $region37: #{rnn_sequence.1} parent=1 // pred_fallthru
      _
    // Predicated region
    $region38: #{rnn_sequence.1} parent=1 // pred_check
      _
    $region39: #{rnn_sequence.1} parent=1 // pred_check_branch
      %2198 = sbr.rel (0) target = $region41
    $region40: #{rnn_sequence.1} parent=1 // pred_region
      _
    $region41: #{rnn_sequence.1} parent=1 // pred_fallthru
      _
    // Predicated region
    $region42: #{rnn_sequence.1} parent=1 // pred_check
      _
    $region43: #{rnn_sequence.1} parent=1 // pred_check_branch
      %2200 = sbr.rel (0) target = $region45
    $region44: #{rnn_sequence.1} parent=1 // pred_region
      %2201 = dma.done [#allocation5], 2048
    $region45: #{rnn_sequence.1} parent=1 // pred_fallthru
      _
    // Predicated region
    $region46: #{rnn_sequence.1} parent=1 // pred_check
      _
    $region47: #{rnn_sequence.1} parent=1 // pred_check_branch
      %2203 = sbr.rel (0) target = $region49
    $region48: #{rnn_sequence.1} parent=1 // pred_region
      _
    $region49: #{rnn_sequence.1} parent=1 // pred_fallthru
      _
    %2204 = vsyncpa [#allocation5], 1

</llo_original>
